<compile_context>
chip_gen: v7x
topology: tpu7x:2x2x1
jax: 0.10.0
libtpu: 0.0.40
codegen_flags: <defaults>
</compile_context>

<pallas_src>
import functools

import jax
import jax.numpy as jnp
from jax.experimental import pallas as pl
from jax.experimental.pallas import tpu as pltpu

NEG_SLOPE = 0.2                      # LeakyReLU negative slope of the module
VMEM_LIMIT = 48 * 1024 * 1024        # headroom below v7x's 64 MiB physical VMEM


def _leaky_relu(h):
    return jnp.where(h >= 0, h, NEG_SLOPE * h)


def _pick_kt(K, N):
    """Largest kt <= 8 that divides K with kt*N a multiple of 128 (lane-aligned
    edge blocks).  Falls back to kt=K (block equals full merged dim, always legal)."""
    for d in range(min(K, 8), 0, -1):
        if K % d == 0 and (d * N) % 128 == 0:
            return d
    return K


# ---------------------------------------------------------------------------
# Kernel 1: tiled pairwise negative squared distance (the knn metric)
#   out[b, i, j] = 2 <x_i, x_j> - ||x_i||^2 - ||x_j||^2
# ---------------------------------------------------------------------------
def _neg_pairdist_kernel(xi_ref, x_ref, sqc_ref, o_ref):
    xi = xi_ref[0]                                   # (C, TI) f32   row block
    x = x_ref[0]                                     # (C, N)  f32   full (resident)
    sq_i = sqc_ref[0]                                # (TI, 1) f32   row norms
    g = jax.lax.dot_general(xi, x, (((0,), (0,)), ((), ())),
                            preferred_element_type=jnp.float32)      # (TI, N)
    sq_j = jnp.sum(x * x, axis=0, keepdims=True)     # (1, N) sublane reduce
    o_ref[0] = (2.0 * g - sq_i - sq_j).astype(o_ref.dtype)


def pairwise_neg_sqdist(x):
    """x: (B, C, N) f32 -> (B, N, N) f32 of -squared-distance (larger = closer)."""
    B, C, N = x.shape
    TI = next((t for t in (512, 256, 128) if N % t == 0), N)
    sq_col = jnp.sum(x * x, axis=1)[..., None]       # (B, N, 1), tiny side input
    return pl.pallas_call(
        _neg_pairdist_kernel,
        out_shape=jax.ShapeDtypeStruct((B, N, N), jnp.float32),
        grid_spec=pltpu.PrefetchScalarGridSpec(
            num_scalar_prefetch=0,
            grid=(B, N // TI),
            in_specs=[
                pl.BlockSpec((1, C, TI), lambda b, i: (b, 0, i)),   # row block
                pl.BlockSpec((1, C, N), lambda b, i: (b, 0, 0)),    # full x, resident
                pl.BlockSpec((1, TI, 1), lambda b, i: (b, i, 0)),   # row norms
            ],
            out_specs=pl.BlockSpec((1, TI, N), lambda b, i: (b, i, 0)),
        ),
        compiler_params=pltpu.CompilerParams(
            dimension_semantics=("parallel", "parallel"),
            vmem_limit_bytes=VMEM_LIMIT),
    )(x, x, sq_col)


# ---------------------------------------------------------------------------
# Kernel 2: EdgeConv block 1 (6 -> 64 -> 64, LeakyReLU, max over k)
# Edge features arrive channels-first with k and N merged on the lane dim:
# (B, 2C, K*N).  Grid = (B, K//kt); each step runs one folded
# (Cm,2C)@(2C,kt*N) matmul, a 64x64 matmul, and max-accumulates directly into
# the resident output block (no scratch).
# ---------------------------------------------------------------------------
def _make_edge_conv_kernel(kt, n):
    def kernel(e_ref, wa_ref, wb_ref, o_ref):
        j = pl.program_id(1)
        h = jnp.dot(wa_ref[...], e_ref[0],
                    preferred_element_type=jnp.float32)              # (Cm, kt*N)
        h = _leaky_relu(h)
        h = jnp.dot(wb_ref[...], h.astype(jnp.bfloat16),
                    preferred_element_type=jnp.float32)              # (Co, kt*N)
        h = _leaky_relu(h)
        m = h[:, :n]
        for t in range(1, kt):                                       # max over kt slabs
            m = jnp.maximum(m, h[:, t * n:(t + 1) * n])

        @pl.when(j == 0)
        def _():
            o_ref[0] = m.astype(o_ref.dtype)

        @pl.when(j > 0)
        def _():
            o_ref[0] = jnp.maximum(o_ref[0], m.astype(o_ref.dtype))
    return kernel


def edge_conv(edge, wa, wb, *, K, N, kt):
    """edge: (B, 2C, K*N) bf16; wa: (Cm, 2C) bf16; wb: (Co, Cm) bf16.
    Returns (B, Co, N) f32 (max over the k neighbor slots already taken)."""
    assert K % kt == 0
    B, C2, _ = edge.shape
    Cm, Co = wa.shape[0], wb.shape[0]
    return pl.pallas_call(
        _make_edge_conv_kernel(kt, N),
        out_shape=jax.ShapeDtypeStruct((B, Co, N), jnp.float32),
        grid_spec=pltpu.PrefetchScalarGridSpec(
            num_scalar_prefetch=0,
            grid=(B, K // kt),
            in_specs=[
                pl.BlockSpec((1, C2, kt * N), lambda b, j: (b, 0, j)),
                pl.BlockSpec((Cm, C2), lambda b, j: (0, 0)),
                pl.BlockSpec((Co, Cm), lambda b, j: (0, 0)),
            ],
            out_specs=pl.BlockSpec((1, Co, N), lambda b, j: (b, 0, 0)),
        ),
        compiler_params=pltpu.CompilerParams(
            dimension_semantics=("parallel", "arbitrary"),
            vmem_limit_bytes=VMEM_LIMIT),
    )(edge, wa, wb)


# ---------------------------------------------------------------------------
# Kernel 3: EdgeConv block 2 with the first 1x1 conv pre-applied.  Input is the
# gathered pre-activation (B, Cm, K*N) bf16; the kernel does
# LeakyReLU -> Wb matmul -> LeakyReLU -> max over k, into the resident output.
# ---------------------------------------------------------------------------
def _make_preact_conv_kernel(kt, n):
    def kernel(p_ref, wb_ref, o_ref):
        j = pl.program_id(1)
        h = _leaky_relu(p_ref[0])                                    # bf16 (Cm, kt*N)
        h = jnp.dot(wb_ref[...], h,
                    preferred_element_type=jnp.float32)              # (Co, kt*N)
        h = _leaky_relu(h)
        m = h[:, :n]
        for t in range(1, kt):
            m = jnp.maximum(m, h[:, t * n:(t + 1) * n])

        @pl.when(j == 0)
        def _():
            o_ref[0] = m.astype(o_ref.dtype)

        @pl.when(j > 0)
        def _():
            o_ref[0] = jnp.maximum(o_ref[0], m.astype(o_ref.dtype))
    return kernel


def preact_conv_max(pre, wb, *, K, N, kt):
    """pre: (B, Cm, K*N) bf16 first-conv pre-activations; wb: (Co, Cm) bf16."""
    assert K % kt == 0
    B, Cm, _ = pre.shape
    Co = wb.shape[0]
    return pl.pallas_call(
        _make_preact_conv_kernel(kt, N),
        out_shape=jax.ShapeDtypeStruct((B, Co, N), jnp.float32),
        grid_spec=pltpu.PrefetchScalarGridSpec(
            num_scalar_prefetch=0,
            grid=(B, K // kt),
            in_specs=[
                pl.BlockSpec((1, Cm, kt * N), lambda b, j: (b, 0, j)),
                pl.BlockSpec((Co, Cm), lambda b, j: (0, 0)),
            ],
            out_specs=pl.BlockSpec((1, Co, N), lambda b, j: (b, 0, 0)),
        ),
        compiler_params=pltpu.CompilerParams(
            dimension_semantics=("parallel", "arbitrary"),
            vmem_limit_bytes=VMEM_LIMIT),
    )(pre, wb)


# ---------------------------------------------------------------------------
# Host-side graph-feature construction (minor-axis gather, N stays lane-dense)
# ---------------------------------------------------------------------------
def _gather_neighbors(feat, idx_t):
    """feat: (B, C, N); idx_t: (B, K, N) -> (B, C, K, N), nbr[b,c,j,n]=feat[b,c,idx_t[b,j,n]]."""
    return jax.vmap(lambda fb, ib: fb[:, ib])(feat, idx_t)


def build_edge_features(x, idx_t):
    """x: (B, C, N) f32 -> (B, 2C, K*N) bf16, channel order cat(nbr - ctr, ctr)."""
    B, C, N = x.shape
    K = idx_t.shape[1]
    nbr = _gather_neighbors(x, idx_t)                                # (B, C, K, N)
    ctr = x[:, :, None, :]                                           # (B, C, 1, N)
    edge = jnp.concatenate([nbr - ctr, jnp.broadcast_to(ctr, nbr.shape)], axis=1)
    return edge.reshape(B, 2 * C, K * N).astype(jnp.bfloat16)


def build_conv2_preact(x1, idx_t, wa):
    """First 1x1 conv is linear: Wa@[nbr-ctr; ctr] = Wa_nbr@nbr + (Wa_ctr-Wa_nbr)@ctr.
    Precompute both per-point maps, gather the neighbor map, add the center map.
    x1: (B, Cin, N) f32, wa: (Cm, 2*Cin) -> (B, Cm, K*N) bf16."""
    B, Cin, N = x1.shape
    K = idx_t.shape[1]
    wa_nbr, wa_ctr = wa[:, :Cin], wa[:, Cin:]
    P = jnp.einsum("oc,bcn->bon", wa_nbr, x1)                        # (B, Cm, N)
    Q = jnp.einsum("oc,bcn->bon", wa_ctr - wa_nbr, x1)               # (B, Cm, N)
    Pg = _gather_neighbors(P, idx_t)                                 # (B, Cm, K, N)
    pre = Pg + Q[:, :, None, :]
    return pre.reshape(B, P.shape[1], K * N).astype(jnp.bfloat16)


def feature_extract_rec_forward(pc, params, k=20):
    """pc: (B, N, 3) f32. Returns ((B, 128, N) f32, (idx1, idx2))."""
    w1a, w1b, w2a, w2b = params
    B, N, _ = pc.shape
    kt = _pick_kt(k, N)
    x = jnp.transpose(pc, (0, 2, 1))                                 # (B, 3, N)

    # ---- EdgeConv block 1 (conv1: 6 -> 64 -> 64) ----
    d1 = pairwise_neg_sqdist(x)                                      # Pallas
    # TODO(synk): top_k and the data-dependent neighbor gather stay in plain JAX
    # (no clean Pallas TPU equivalent for top-k / dynamic gather).
    idx1 = jax.lax.top_k(d1, k)[1]                                   # (B, N, k)
    idx1_t = jnp.transpose(idx1, (0, 2, 1))                          # (B, k, N)
    e1 = build_edge_features(x, idx1_t)                              # (B, 6, k*N) bf16
    x1 = edge_conv(e1, w1a.astype(jnp.bfloat16), w1b.astype(jnp.bfloat16),
                   K=k, N=N, kt=kt)                                  # (B, 64, N) f32

    # ---- EdgeConv block 2 (conv2: 128 -> 64 -> 64), first conv pre-gather ----
    d2 = pairwise_neg_sqdist(x1)
    idx2 = jax.lax.top_k(d2, k)[1]
    idx2_t = jnp.transpose(idx2, (0, 2, 1))
    p2 = build_conv2_preact(x1, idx2_t, w2a)                         # (B, 64, k*N) bf16
    x2 = preact_conv_max(p2, w2b.astype(jnp.bfloat16), K=k, N=N, kt=kt)

    return jnp.concatenate([x1, x2], axis=1), (idx1, idx2)           # (B, 128, N)


if __name__ == "__main__":
    key = jax.random.PRNGKey(0)
    k_pc, k1, k2, k3, k4 = jax.random.split(key, 5)

    B, N, K = 2, 64, 20                                              # small test shapes
    pc = jax.random.normal(k_pc, (B, N, 3), dtype=jnp.float32)

    # 1x1 conv weights (bias=False in the module); PyTorch-like fan-in scaling.
    w1a = jax.random.normal(k1, (64, 6), jnp.float32) / jnp.sqrt(6.0)
    w1b = jax.random.normal(k2, (64, 64), jnp.float32) / 8.0
    w2a = jax.random.normal(k3, (64, 128), jnp.float32) / jnp.sqrt(128.0)
    w2b = jax.random.normal(k4, (64, 64), jnp.float32) / 8.0
    params = (w1a, w1b, w2a, w2b)

    fwd = jax.jit(functools.partial(feature_extract_rec_forward, k=K))
    out, (idx1, idx2) = fwd(pc, params)
    out = jax.block_until_ready(out)
    assert out.shape == (B, 128, N)

    # ---------------- pure-JAX f32 reference ----------------
    def ref_neg_dist(x):
        inner = jnp.einsum("bci,bcj->bij", x, x)
        sq = jnp.sum(x * x, axis=1)
        return 2.0 * inner - sq[:, :, None] - sq[:, None, :]

    def ref_edge_feat(x, idx):
        Bc = x.shape[0]
        x_t = jnp.transpose(x, (0, 2, 1))
        nbr = x_t[jnp.arange(Bc)[:, None, None], idx]
        ctr = jnp.broadcast_to(x_t[:, :, None, :], nbr.shape)
        return jnp.concatenate([nbr - ctr, ctr], axis=-1)            # (B, N, k, 2C)

    def ref_conv_block(e, wa, wb):
        h = jnp.einsum("oc,bnkc->bnko", wa, e)
        h = jnp.where(h >= 0, h, NEG_SLOPE * h)
        h = jnp.einsum("oc,bnkc->bnko", wb, h)
        h = jnp.where(h >= 0, h, NEG_SLOPE * h)
        return jnp.transpose(jnp.max(h, axis=2), (0, 2, 1))          # (B, C_out, N)

    x0 = jnp.transpose(pc, (0, 2, 1))
    d_kernel = jax.block_until_ready(pairwise_neg_sqdist(x0))
    assert jnp.allclose(d_kernel, ref_neg_dist(x0), atol=1e-3, rtol=1e-3)

    # End-to-end reference sharing the neighbor indices produced by the kernel
    # path (avoids spurious mismatches from top-k tie flips); compute stays f32.
    x1_ref = ref_conv_block(ref_edge_feat(x0, idx1), w1a, w1b)
    x2_ref = ref_conv_block(ref_edge_feat(x1_ref, idx2), w2a, w2b)
    expected = jnp.concatenate([x1_ref, x2_ref], axis=1)

    # bf16 MXU operands / bf16 edge tensors with f32 accumulation -> loose tol.
    assert jnp.allclose(out, expected, atol=1e-1, rtol=1e-1)

    print("KERNEL_OK")
</pallas_src>

<mosaic_0001>
module attributes {stable_mosaic.version = 11 : i64} {
  func.func @_neg_pairdist_kernel(%arg0: i32, %arg1: i32, %arg2: memref<1x3x64xf32, #tpu.memory_space<vmem>>, %arg3: memref<1x3x64xf32, #tpu.memory_space<vmem>>, %arg4: memref<1x64x1xf32, #tpu.memory_space<vmem>>, %arg5: memref<1x64x64xf32, #tpu.memory_space<vmem>>) attributes {dimension_semantics = [#tpu.dimension_semantics<parallel>, #tpu.dimension_semantics<parallel>], iteration_bounds = array<i64: 2, 1>, scalar_prefetch = 0 : i64, scratch_operands = 0 : i64, tpu.core_type = #tpu.core_type<tc>, window_params = [{transform_indices = @transform_0, window_bounds = array<i64: 1, 3, 64>}, {transform_indices = @transform_1, window_bounds = array<i64: 1, 3, 64>}, {transform_indices = @transform_2, window_bounds = array<i64: 1, 64, 1>}, {transform_indices = @transform_3, window_bounds = array<i64: 1, 64, 64>}]} {
    %c0 = arith.constant 0 : index
    %c0_0 = arith.constant 0 : index
    %c0_1 = arith.constant 0 : index
    %0 = vector.load %arg2[%c0, %c0_0, %c0_1] : memref<1x3x64xf32, #tpu.memory_space<vmem>>, vector<1x3x64xf32>
    %1 = vector.shape_cast %0 : vector<1x3x64xf32> to vector<3x64xf32>
    %c0_2 = arith.constant 0 : index
    %c0_3 = arith.constant 0 : index
    %c0_4 = arith.constant 0 : index
    %2 = vector.load %arg3[%c0_2, %c0_3, %c0_4] : memref<1x3x64xf32, #tpu.memory_space<vmem>>, vector<1x3x64xf32>
    %3 = vector.shape_cast %2 : vector<1x3x64xf32> to vector<3x64xf32>
    %c0_5 = arith.constant 0 : index
    %c0_6 = arith.constant 0 : index
    %c0_7 = arith.constant 0 : index
    %4 = vector.load %arg4[%c0_5, %c0_6, %c0_7] : memref<1x64x1xf32, #tpu.memory_space<vmem>>, vector<1x64x1xf32>
    %5 = vector.shape_cast %4 : vector<1x64x1xf32> to vector<64x1xf32>
    %cst = arith.constant dense<0.000000e+00> : vector<64x64xf32>
    %6 = tpu.matmul %1, %3, %cst {dimension_numbers = #tpu.dot_dimension_numbers<[0], [0], [1], [1], [0, 1, 1, 1], [], []>} : vector<3x64xf32>, vector<3x64xf32>, vector<64x64xf32> -> vector<64x64xf32>
    %7 = arith.mulf %3, %3 : vector<3x64xf32>
    %cst_8 = arith.constant dense<0.000000e+00> : vector<64xf32>
    %8 = vector.multi_reduction <add>, %7, %cst_8 [0] : vector<3x64xf32> to vector<64xf32>
    %9 = vector.shape_cast %8 : vector<64xf32> to vector<1x64xf32>
    %cst_9 = arith.constant 2.000000e+00 : f32
    %10 = vector.broadcast %cst_9 : f32 to vector<64x64xf32>
    %11 = arith.mulf %10, %6 : vector<64x64xf32>
    %12 = vector.broadcast %5 : vector<64x1xf32> to vector<64x64xf32>
    %13 = arith.subf %11, %12 : vector<64x64xf32>
    %14 = vector.broadcast %9 : vector<1x64xf32> to vector<64x64xf32>
    %15 = arith.subf %13, %14 : vector<64x64xf32>
    %c0_10 = arith.constant 0 : index
    %c0_11 = arith.constant 0 : index
    %c0_12 = arith.constant 0 : index
    %16 = vector.load %arg5[%c0_10, %c0_11, %c0_12] : memref<1x64x64xf32, #tpu.memory_space<vmem>>, vector<1x64x64xf32>
    %17 = vector.shape_cast %16 : vector<1x64x64xf32> to vector<64x64xf32>
    %18 = vector.shape_cast %15 : vector<64x64xf32> to vector<1x64x64xf32>
    tpu.vector_store %arg5[%c0_10, %c0_11, %c0_12], %18 {strides = array<i32>} : memref<1x64x64xf32, #tpu.memory_space<vmem>>, vector<1x64x64xf32>,
    return
  }
  func.func @transform_0(%arg0: i32, %arg1: i32) -> (i32, i32, i32) {
    %c0_i32 = arith.constant 0 : i32
    %c0_i32_0 = arith.constant 0 : i32
    return %arg0, %c0_i32, %arg1 : i32, i32, i32
  }
  func.func @transform_1(%arg0: i32, %arg1: i32) -> (i32, i32, i32) {
    %c0_i32 = arith.constant 0 : i32
    %c0_i32_0 = arith.constant 0 : i32
    %c0_i32_1 = arith.constant 0 : i32
    return %arg0, %c0_i32, %c0_i32_0 : i32, i32, i32
  }
  func.func @transform_2(%arg0: i32, %arg1: i32) -> (i32, i32, i32) {
    %c0_i32 = arith.constant 0 : i32
    %c0_i32_0 = arith.constant 0 : i32
    return %arg0, %arg1, %c0_i32 : i32, i32, i32
  }
  func.func @transform_3(%arg0: i32, %arg1: i32) -> (i32, i32, i32) {
    %c0_i32 = arith.constant 0 : i32
    %c0_i32_0 = arith.constant 0 : i32
    return %arg0, %arg1, %c0_i32 : i32, i32, i32
  }
}

module attributes {stable_mosaic.version = 11 : i64} {
  func.func @kernel(%arg0: i32, %arg1: i32, %arg2: memref<1x6x256xbf16, #tpu.memory_space<vmem>>, %arg3: memref<64x6xbf16, #tpu.memory_space<vmem>>, %arg4: memref<64x64xbf16, #tpu.memory_space<vmem>>, %arg5: memref<1x64x64xf32, #tpu.memory_space<vmem>>) attributes {dimension_semantics = [#tpu.dimension_semantics<parallel>, #tpu.dimension_semantics<arbitrary>], iteration_bounds = array<i64: 2, 5>, scalar_prefetch = 0 : i64, scratch_operands = 0 : i64, tpu.core_type = #tpu.core_type<tc>, window_params = [{transform_indices = @transform_0, window_bounds = array<i64: 1, 6, 256>}, {pipeline_mode = #tpu.pipeline_mode<synchronous>, transform_indices = @transform_1, window_bounds = array<i64: 64, 6>}, {pipeline_mode = #tpu.pipeline_mode<synchronous>, transform_indices = @transform_2, window_bounds = array<i64: 64, 64>}, {transform_indices = @transform_3, window_bounds = array<i64: 1, 64, 64>}]} {
    %c0 = arith.constant 0 : index
    %c0_0 = arith.constant 0 : index
    %0 = vector.load %arg3[%c0, %c0_0] : memref<64x6xbf16, #tpu.memory_space<vmem>>, vector<64x6xbf16>
    %c0_1 = arith.constant 0 : index
    %c0_2 = arith.constant 0 : index
    %c0_3 = arith.constant 0 : index
    %1 = vector.load %arg2[%c0_1, %c0_2, %c0_3] : memref<1x6x256xbf16, #tpu.memory_space<vmem>>, vector<1x6x256xbf16>
    %2 = vector.shape_cast %1 : vector<1x6x256xbf16> to vector<6x256xbf16>
    %cst = arith.constant dense<0.000000e+00> : vector<64x256xf32>
    %3 = tpu.matmul %0, %2, %cst {dimension_numbers = #tpu.dot_dimension_numbers<[1], [0], [0], [1], [0, 0, 1, 1], [], []>} : vector<64x6xbf16>, vector<6x256xbf16>, vector<64x256xf32> -> vector<64x256xf32>
    %cst_4 = arith.constant 0.000000e+00 : f32
    %4 = vector.broadcast %cst_4 : f32 to vector<64x256xf32>
    %5 = arith.cmpf oge, %3, %4 : vector<64x256xf32>
    %cst_5 = arith.constant 2.000000e-01 : f32
    %6 = vector.broadcast %cst_5 : f32 to vector<64x256xf32>
    %7 = arith.mulf %6, %3 : vector<64x256xf32>
    %8 = arith.select %5, %3, %7 : vector<64x256xi1>, vector<64x256xf32>
    %c0_6 = arith.constant 0 : index
    %c0_7 = arith.constant 0 : index
    %9 = vector.load %arg4[%c0_6, %c0_7] : memref<64x64xbf16, #tpu.memory_space<vmem>>, vector<64x64xbf16>
    %10 = arith.truncf %8 : vector<64x256xf32> to vector<64x256xbf16>
    %cst_8 = arith.constant dense<0.000000e+00> : vector<64x256xf32>
    %11 = tpu.matmul %9, %10, %cst_8 {dimension_numbers = #tpu.dot_dimension_numbers<[1], [0], [0], [1], [0, 0, 1, 1], [], []>} : vector<64x64xbf16>, vector<64x256xbf16>, vector<64x256xf32> -> vector<64x256xf32>
    %cst_9 = arith.constant 0.000000e+00 : f32
    %12 = vector.broadcast %cst_9 : f32 to vector<64x256xf32>
    %13 = arith.cmpf oge, %11, %12 : vector<64x256xf32>
    %cst_10 = arith.constant 2.000000e-01 : f32
    %14 = vector.broadcast %cst_10 : f32 to vector<64x256xf32>
    %15 = arith.mulf %14, %11 : vector<64x256xf32>
    %16 = arith.select %13, %11, %15 : vector<64x256xi1>, vector<64x256xf32>
    %17 = vector.extract_strided_slice %16 {offsets = [0, 0], sizes = [64, 64], strides = [1, 1]} : vector<64x256xf32> to vector<64x64xf32>
    %18 = vector.extract_strided_slice %16 {offsets = [0, 64], sizes = [64, 64], strides = [1, 1]} : vector<64x256xf32> to vector<64x64xf32>
    %19 = arith.maximumf %17, %18 : vector<64x64xf32>
    %20 = vector.extract_strided_slice %16 {offsets = [0, 128], sizes = [64, 64], strides = [1, 1]} : vector<64x256xf32> to vector<64x64xf32>
    %21 = arith.maximumf %19, %20 : vector<64x64xf32>
    %22 = vector.extract_strided_slice %16 {offsets = [0, 192], sizes = [64, 64], strides = [1, 1]} : vector<64x256xf32> to vector<64x64xf32>
    %23 = arith.maximumf %21, %22 : vector<64x64xf32>
    %c0_i32 = arith.constant 0 : i32
    %24 = arith.cmpi eq, %arg1, %c0_i32 : i32
    %25 = arith.extui %24 : i1 to i32
    %c0_i32_11 = arith.constant 0 : i32
    %26 = arith.cmpi ne, %25, %c0_i32_11 : i32
    scf.if %26 {
      %c0_14 = arith.constant 0 : index
      %c0_15 = arith.constant 0 : index
      %c0_16 = arith.constant 0 : index
      %30 = vector.load %arg5[%c0_14, %c0_15, %c0_16] : memref<1x64x64xf32, #tpu.memory_space<vmem>>, vector<1x64x64xf32>
      %31 = vector.shape_cast %30 : vector<1x64x64xf32> to vector<64x64xf32>
      %32 = vector.shape_cast %23 : vector<64x64xf32> to vector<1x64x64xf32>
      tpu.vector_store %arg5[%c0_14, %c0_15, %c0_16], %32 {strides = array<i32>} : memref<1x64x64xf32, #tpu.memory_space<vmem>>, vector<1x64x64xf32>,
    } else {
    }
    %c0_i32_12 = arith.constant 0 : i32
    %27 = arith.cmpi sgt, %arg1, %c0_i32_12 : i32
    %28 = arith.extui %27 : i1 to i32
    %c0_i32_13 = arith.constant 0 : i32
    %29 = arith.cmpi ne, %28, %c0_i32_13 : i32
    scf.if %29 {
      %c0_14 = arith.constant 0 : index
      %c0_15 = arith.constant 0 : index
      %c0_16 = arith.constant 0 : index
      %30 = vector.load %arg5[%c0_14, %c0_15, %c0_16] : memref<1x64x64xf32, #tpu.memory_space<vmem>>, vector<1x64x64xf32>
      %31 = vector.shape_cast %30 : vector<1x64x64xf32> to vector<64x64xf32>
      %32 = arith.maximumf %31, %23 : vector<64x64xf32>
      %c0_17 = arith.constant 0 : index
      %c0_18 = arith.constant 0 : index
      %c0_19 = arith.constant 0 : index
      %33 = vector.load %arg5[%c0_17, %c0_18, %c0_19] : memref<1x64x64xf32, #tpu.memory_space<vmem>>, vector<1x64x64xf32>
      %34 = vector.shape_cast %33 : vector<1x64x64xf32> to vector<64x64xf32>
      %35 = vector.shape_cast %32 : vector<64x64xf32> to vector<1x64x64xf32>
      tpu.vector_store %arg5[%c0_17, %c0_18, %c0_19], %35 {strides = array<i32>} : memref<1x64x64xf32, #tpu.memory_space<vmem>>, vector<1x64x64xf32>,
    } else {
    }
    return
  }
  func.func @transform_0(%arg0: i32, %arg1: i32) -> (i32, i32, i32) {
    %c0_i32 = arith.constant 0 : i32
    %c0_i32_0 = arith.constant 0 : i32
    return %arg0, %c0_i32, %arg1 : i32, i32, i32
  }
  func.func @transform_1(%arg0: i32, %arg1: i32) -> (i32, i32) {
    %c0_i32 = arith.constant 0 : i32
    %c0_i32_0 = arith.constant 0 : i32
    %c0_i32_1 = arith.constant 0 : i32
    return %c0_i32, %c0_i32_0 : i32, i32
  }
  func.func @transform_2(%arg0: i32, %arg1: i32) -> (i32, i32) {
    %c0_i32 = arith.constant 0 : i32
    %c0_i32_0 = arith.constant 0 : i32
    %c0_i32_1 = arith.constant 0 : i32
    return %c0_i32, %c0_i32_0 : i32, i32
  }
  func.func @transform_3(%arg0: i32, %arg1: i32) -> (i32, i32, i32) {
    %c0_i32 = arith.constant 0 : i32
    %c0_i32_0 = arith.constant 0 : i32
    %c0_i32_1 = arith.constant 0 : i32
    return %arg0, %c0_i32, %c0_i32_0 : i32, i32, i32
  }
}

module attributes {stable_mosaic.version = 11 : i64} {
  func.func @_neg_pairdist_kernel(%arg0: i32, %arg1: i32, %arg2: memref<1x64x64xf32, #tpu.memory_space<vmem>>, %arg3: memref<1x64x64xf32, #tpu.memory_space<vmem>>, %arg4: memref<1x64x1xf32, #tpu.memory_space<vmem>>, %arg5: memref<1x64x64xf32, #tpu.memory_space<vmem>>) attributes {dimension_semantics = [#tpu.dimension_semantics<parallel>, #tpu.dimension_semantics<parallel>], iteration_bounds = array<i64: 2, 1>, scalar_prefetch = 0 : i64, scratch_operands = 0 : i64, tpu.core_type = #tpu.core_type<tc>, window_params = [{transform_indices = @transform_0, window_bounds = array<i64: 1, 64, 64>}, {transform_indices = @transform_1, window_bounds = array<i64: 1, 64, 64>}, {transform_indices = @transform_2, window_bounds = array<i64: 1, 64, 1>}, {transform_indices = @transform_3, window_bounds = array<i64: 1, 64, 64>}]} {
    %c0 = arith.constant 0 : index
    %c0_0 = arith.constant 0 : index
    %c0_1 = arith.constant 0 : index
    %0 = vector.load %arg2[%c0, %c0_0, %c0_1] : memref<1x64x64xf32, #tpu.memory_space<vmem>>, vector<1x64x64xf32>
    %1 = vector.shape_cast %0 : vector<1x64x64xf32> to vector<64x64xf32>
    %c0_2 = arith.constant 0 : index
    %c0_3 = arith.constant 0 : index
    %c0_4 = arith.constant 0 : index
    %2 = vector.load %arg3[%c0_2, %c0_3, %c0_4] : memref<1x64x64xf32, #tpu.memory_space<vmem>>, vector<1x64x64xf32>
    %3 = vector.shape_cast %2 : vector<1x64x64xf32> to vector<64x64xf32>
    %c0_5 = arith.constant 0 : index
    %c0_6 = arith.constant 0 : index
    %c0_7 = arith.constant 0 : index
    %4 = vector.load %arg4[%c0_5, %c0_6, %c0_7] : memref<1x64x1xf32, #tpu.memory_space<vmem>>, vector<1x64x1xf32>
    %5 = vector.shape_cast %4 : vector<1x64x1xf32> to vector<64x1xf32>
    %cst = arith.constant dense<0.000000e+00> : vector<64x64xf32>
    %6 = tpu.matmul %1, %3, %cst {dimension_numbers = #tpu.dot_dimension_numbers<[0], [0], [1], [1], [0, 1, 1, 1], [], []>} : vector<64x64xf32>, vector<64x64xf32>, vector<64x64xf32> -> vector<64x64xf32>
    %7 = arith.mulf %3, %3 : vector<64x64xf32>
    %cst_8 = arith.constant dense<0.000000e+00> : vector<64xf32>
    %8 = vector.multi_reduction <add>, %7, %cst_8 [0] : vector<64x64xf32> to vector<64xf32>
    %9 = vector.shape_cast %8 : vector<64xf32> to vector<1x64xf32>
    %cst_9 = arith.constant 2.000000e+00 : f32
    %10 = vector.broadcast %cst_9 : f32 to vector<64x64xf32>
    %11 = arith.mulf %10, %6 : vector<64x64xf32>
    %12 = vector.broadcast %5 : vector<64x1xf32> to vector<64x64xf32>
    %13 = arith.subf %11, %12 : vector<64x64xf32>
    %14 = vector.broadcast %9 : vector<1x64xf32> to vector<64x64xf32>
    %15 = arith.subf %13, %14 : vector<64x64xf32>
    %c0_10 = arith.constant 0 : index
    %c0_11 = arith.constant 0 : index
    %c0_12 = arith.constant 0 : index
    %16 = vector.load %arg5[%c0_10, %c0_11, %c0_12] : memref<1x64x64xf32, #tpu.memory_space<vmem>>, vector<1x64x64xf32>
    %17 = vector.shape_cast %16 : vector<1x64x64xf32> to vector<64x64xf32>
    %18 = vector.shape_cast %15 : vector<64x64xf32> to vector<1x64x64xf32>
    tpu.vector_store %arg5[%c0_10, %c0_11, %c0_12], %18 {strides = array<i32>} : memref<1x64x64xf32, #tpu.memory_space<vmem>>, vector<1x64x64xf32>,
    return
  }
  func.func @transform_0(%arg0: i32, %arg1: i32) -> (i32, i32, i32) {
    %c0_i32 = arith.constant 0 : i32
    %c0_i32_0 = arith.constant 0 : i32
    return %arg0, %c0_i32, %arg1 : i32, i32, i32
  }
  func.func @transform_1(%arg0: i32, %arg1: i32) -> (i32, i32, i32) {
    %c0_i32 = arith.constant 0 : i32
    %c0_i32_0 = arith.constant 0 : i32
    %c0_i32_1 = arith.constant 0 : i32
    return %arg0, %c0_i32, %c0_i32_0 : i32, i32, i32
  }
  func.func @transform_2(%arg0: i32, %arg1: i32) -> (i32, i32, i32) {
    %c0_i32 = arith.constant 0 : i32
    %c0_i32_0 = arith.constant 0 : i32
    return %arg0, %arg1, %c0_i32 : i32, i32, i32
  }
  func.func @transform_3(%arg0: i32, %arg1: i32) -> (i32, i32, i32) {
    %c0_i32 = arith.constant 0 : i32
    %c0_i32_0 = arith.constant 0 : i32
    return %arg0, %arg1, %c0_i32 : i32, i32, i32
  }
}

module attributes {stable_mosaic.version = 11 : i64} {
  func.func @kernel(%arg0: i32, %arg1: i32, %arg2: memref<1x64x256xbf16, #tpu.memory_space<vmem>>, %arg3: memref<64x64xbf16, #tpu.memory_space<vmem>>, %arg4: memref<1x64x64xf32, #tpu.memory_space<vmem>>) attributes {dimension_semantics = [#tpu.dimension_semantics<parallel>, #tpu.dimension_semantics<arbitrary>], iteration_bounds = array<i64: 2, 5>, scalar_prefetch = 0 : i64, scratch_operands = 0 : i64, tpu.core_type = #tpu.core_type<tc>, window_params = [{transform_indices = @transform_0, window_bounds = array<i64: 1, 64, 256>}, {pipeline_mode = #tpu.pipeline_mode<synchronous>, transform_indices = @transform_1, window_bounds = array<i64: 64, 64>}, {transform_indices = @transform_2, window_bounds = array<i64: 1, 64, 64>}]} {
    %c0 = arith.constant 0 : index
    %c0_0 = arith.constant 0 : index
    %c0_1 = arith.constant 0 : index
    %0 = vector.load %arg2[%c0, %c0_0, %c0_1] : memref<1x64x256xbf16, #tpu.memory_space<vmem>>, vector<1x64x256xbf16>
    %1 = vector.shape_cast %0 : vector<1x64x256xbf16> to vector<64x256xbf16>
    %cst = arith.constant 0.000000e+00 : bf16
    %2 = vector.broadcast %cst : bf16 to vector<64x256xbf16>
    %3 = arith.cmpf oge, %1, %2 : vector<64x256xbf16>
    %cst_2 = arith.constant 2.001950e-01 : bf16
    %4 = vector.broadcast %cst_2 : bf16 to vector<64x256xbf16>
    %5 = arith.mulf %4, %1 : vector<64x256xbf16>
    %6 = arith.select %3, %1, %5 : vector<64x256xi1>, vector<64x256xbf16>
    %c0_3 = arith.constant 0 : index
    %c0_4 = arith.constant 0 : index
    %7 = vector.load %arg3[%c0_3, %c0_4] : memref<64x64xbf16, #tpu.memory_space<vmem>>, vector<64x64xbf16>
    %cst_5 = arith.constant dense<0.000000e+00> : vector<64x256xf32>
    %8 = tpu.matmul %7, %6, %cst_5 {dimension_numbers = #tpu.dot_dimension_numbers<[1], [0], [0], [1], [0, 0, 1, 1], [], []>} : vector<64x64xbf16>, vector<64x256xbf16>, vector<64x256xf32> -> vector<64x256xf32>
    %cst_6 = arith.constant 0.000000e+00 : f32
    %9 = vector.broadcast %cst_6 : f32 to vector<64x256xf32>
    %10 = arith.cmpf oge, %8, %9 : vector<64x256xf32>
    %cst_7 = arith.constant 2.000000e-01 : f32
    %11 = vector.broadcast %cst_7 : f32 to vector<64x256xf32>
    %12 = arith.mulf %11, %8 : vector<64x256xf32>
    %13 = arith.select %10, %8, %12 : vector<64x256xi1>, vector<64x256xf32>
    %14 = vector.extract_strided_slice %13 {offsets = [0, 0], sizes = [64, 64], strides = [1, 1]} : vector<64x256xf32> to vector<64x64xf32>
    %15 = vector.extract_strided_slice %13 {offsets = [0, 64], sizes = [64, 64], strides = [1, 1]} : vector<64x256xf32> to vector<64x64xf32>
    %16 = arith.maximumf %14, %15 : vector<64x64xf32>
    %17 = vector.extract_strided_slice %13 {offsets = [0, 128], sizes = [64, 64], strides = [1, 1]} : vector<64x256xf32> to vector<64x64xf32>
    %18 = arith.maximumf %16, %17 : vector<64x64xf32>
    %19 = vector.extract_strided_slice %13 {offsets = [0, 192], sizes = [64, 64], strides = [1, 1]} : vector<64x256xf32> to vector<64x64xf32>
    %20 = arith.maximumf %18, %19 : vector<64x64xf32>
    %c0_i32 = arith.constant 0 : i32
    %21 = arith.cmpi eq, %arg1, %c0_i32 : i32
    %22 = arith.extui %21 : i1 to i32
    %c0_i32_8 = arith.constant 0 : i32
    %23 = arith.cmpi ne, %22, %c0_i32_8 : i32
    scf.if %23 {
      %c0_11 = arith.constant 0 : index
      %c0_12 = arith.constant 0 : index
      %c0_13 = arith.constant 0 : index
      %27 = vector.load %arg4[%c0_11, %c0_12, %c0_13] : memref<1x64x64xf32, #tpu.memory_space<vmem>>, vector<1x64x64xf32>
      %28 = vector.shape_cast %27 : vector<1x64x64xf32> to vector<64x64xf32>
      %29 = vector.shape_cast %20 : vector<64x64xf32> to vector<1x64x64xf32>
      tpu.vector_store %arg4[%c0_11, %c0_12, %c0_13], %29 {strides = array<i32>} : memref<1x64x64xf32, #tpu.memory_space<vmem>>, vector<1x64x64xf32>,
    } else {
    }
    %c0_i32_9 = arith.constant 0 : i32
    %24 = arith.cmpi sgt, %arg1, %c0_i32_9 : i32
    %25 = arith.extui %24 : i1 to i32
    %c0_i32_10 = arith.constant 0 : i32
    %26 = arith.cmpi ne, %25, %c0_i32_10 : i32
    scf.if %26 {
      %c0_11 = arith.constant 0 : index
      %c0_12 = arith.constant 0 : index
      %c0_13 = arith.constant 0 : index
      %27 = vector.load %arg4[%c0_11, %c0_12, %c0_13] : memref<1x64x64xf32, #tpu.memory_space<vmem>>, vector<1x64x64xf32>
      %28 = vector.shape_cast %27 : vector<1x64x64xf32> to vector<64x64xf32>
      %29 = arith.maximumf %28, %20 : vector<64x64xf32>
      %c0_14 = arith.constant 0 : index
      %c0_15 = arith.constant 0 : index
      %c0_16 = arith.constant 0 : index
      %30 = vector.load %arg4[%c0_14, %c0_15, %c0_16] : memref<1x64x64xf32, #tpu.memory_space<vmem>>, vector<1x64x64xf32>
      %31 = vector.shape_cast %30 : vector<1x64x64xf32> to vector<64x64xf32>
      %32 = vector.shape_cast %29 : vector<64x64xf32> to vector<1x64x64xf32>
      tpu.vector_store %arg4[%c0_14, %c0_15, %c0_16], %32 {strides = array<i32>} : memref<1x64x64xf32, #tpu.memory_space<vmem>>, vector<1x64x64xf32>,
    } else {
    }
    return
  }
  func.func @transform_0(%arg0: i32, %arg1: i32) -> (i32, i32, i32) {
    %c0_i32 = arith.constant 0 : i32
    %c0_i32_0 = arith.constant 0 : i32
    return %arg0, %c0_i32, %arg1 : i32, i32, i32
  }
  func.func @transform_1(%arg0: i32, %arg1: i32) -> (i32, i32) {
    %c0_i32 = arith.constant 0 : i32
    %c0_i32_0 = arith.constant 0 : i32
    %c0_i32_1 = arith.constant 0 : i32
    return %c0_i32, %c0_i32_0 : i32, i32
  }
  func.func @transform_2(%arg0: i32, %arg1: i32) -> (i32, i32, i32) {
    %c0_i32 = arith.constant 0 : i32
    %c0_i32_0 = arith.constant 0 : i32
    %c0_i32_1 = arith.constant 0 : i32
    return %arg0, %c0_i32, %c0_i32_0 : i32, i32, i32
  }
}

</mosaic_0001>

<llo_original>
// kernel: feature_extract_rec_forward.4
$region0: #{feature_extract_rec_forward.4}
  #allocation0 [shape = 'u32[]', space=smem, size = 0x4, offset = 0x4, fixed_abs, tag = 'smem constant byte address 0x4 - core index']
  #allocation1 [shape = 'u32[144,128]{1,0:T(1,128)}', space=vmem, size = 0x12000, scoped, tag = 'internal scratch']
  %s0 = inlined_call_operand.vmem [shape: f32[2,3,64], index: 0, kind: input, shape index: {}, may-alias: {0,1}]
  %s1 = inlined_call_operand.vmem [shape: f32[2,3,64], index: 1, kind: input, shape index: {}, may-alias: {0,1}]
  %s2 = inlined_call_operand.vmem [shape: f32[2,64,1], index: 2, kind: input, shape index: {}]
  %s3 = inlined_call_operand.vmem [shape: f32[2,64,64], index: 3, kind: output, shape index: {}]
  %s4 = sld [smem:[#allocation0]]
  $region45: #{feature_extract_rec_forward.4} parent=0
    _
  %s6 = ssub.s32 1, %s4
  %s7 = scalar_select 0, %s6, %s4
  loop: start=0, step=1, limit=4
  $region2: #{feature_extract_rec_forward.4} parent=0 // loop_pre_header
    _
  $region3: #{feature_extract_rec_forward.4} parent=0 // loop_header
    %s9 = sphi 0, %s13
    %p10 = scmp.ge.s32.totalorder %s9, 4
    %s16 = sphi 0, %s28
    %s17 = sphi 0, %s24
    %s18 = sphi 0, %s16
    %s19 = sphi 0, %s17
    %s20 = sphi 0, %s18
    %s21 = sphi 0, %s19
    %s33 = sphi 0, %s35
    %s36 = sphi 0, %s33
    %s37 = sphi 0, %s36
    %s53 = sphi 0, %s37
    %s59 = sphi 0, %s61
    %s62 = sphi 0, %s59
    %s63 = sphi 0, %s62
    %s79 = sphi 0, %s63
    %s87 = sphi 0, %s89
    %s90 = sphi 0, %s87
    %s91 = sphi 0, %s90
    %s107 = sphi 0, %s91
    %s115 = sphi 0, %s117
    %s118 = sphi 0, %s115
    %s119 = sphi 0, %s118
    %s135 = sphi 0, %s119
  $region4: #{feature_extract_rec_forward.4} parent=0 // loop_header_branch
    %12 = sbr.rel (%p10) target = $region8
  $region5: #{feature_extract_rec_forward.4} parent=0 // loop_body
    %s14 = ssub.s32 %s9, 1
    %s15 = ssub.s32 %s9, 2
    %s22 = sadd.s32 1, %s17
    %p23 = scmp.ge.s32.totalorder %s22, 1
    %s24 = scalar_select %p23, 0, %s22
    %s25 = sadd.s32 1, %s16
    %s26 = scalar_select %p23, %s25, %s16
    %p27 = scmp.ge.s32.totalorder %s26, 2
    %s28 = scalar_select %p27, 0, %s26
    %s29 = ssub.s32 %s16, %s28
    %s30 = ssub.s32 %s17, %s24
    %s31 = sor.u32 %s29, %s30
    %p32 = scmp.eq.s32.totalorder %s31, 0
    %s34 = sadd.s32 %s33, 1
    %s35 = scalar_select %p32, %s33, %s34
    %p38 = pneg %p32
    %p39 = scmp.eq.s32.totalorder %s9, 1
    %p40 = por %p38, %p39
    %p41 = scmp.ne.s32.totalorder %s33, %s36
    %p42 = scmp.eq.s32.totalorder %s9, 0
    %p43 = por %p41, %p42
    %p44 = scmp.ne.s32.totalorder %s33, %s36
    %p45 = scmp.eq.s32.totalorder %s14, 1
    %p46 = por %p44, %p45
    %p47 = scmp.ne.s32.totalorder %s36, %s37
    %p48 = scmp.eq.s32.totalorder %s14, 0
    %p49 = por %p47, %p48
    %p50 = scmp.ne.s32.totalorder %s36, %s37
    %p51 = scmp.eq.s32.totalorder %s15, 1
    %p52 = por %p50, %p51
    %p54 = scmp.ne.s32.totalorder %s37, %s53
    %p55 = scmp.eq.s32.totalorder %s15, 0
    %p56 = por %p54, %p55
    %s57 = ssub.s32 %s16, %s28
    %p58 = scmp.eq.s32.totalorder %s57, 0
    %s60 = sadd.s32 %s59, 1
    %s61 = scalar_select %p58, %s59, %s60
    %p64 = pneg %p58
    %p65 = scmp.eq.s32.totalorder %s9, 1
    %p66 = por %p64, %p65
    %p67 = scmp.ne.s32.totalorder %s59, %s62
    %p68 = scmp.eq.s32.totalorder %s9, 0
    %p69 = por %p67, %p68
    %p70 = scmp.ne.s32.totalorder %s59, %s62
    %p71 = scmp.eq.s32.totalorder %s14, 1
    %p72 = por %p70, %p71
    %p73 = scmp.ne.s32.totalorder %s62, %s63
    %p74 = scmp.eq.s32.totalorder %s14, 0
    %p75 = por %p73, %p74
    %p76 = scmp.ne.s32.totalorder %s62, %s63
    %p77 = scmp.eq.s32.totalorder %s15, 1
    %p78 = por %p76, %p77
    %p80 = scmp.ne.s32.totalorder %s63, %s79
    %p81 = scmp.eq.s32.totalorder %s15, 0
    %p82 = por %p80, %p81
    %s83 = ssub.s32 %s16, %s28
    %s84 = ssub.s32 %s17, %s24
    %s85 = sor.u32 %s83, %s84
    %p86 = scmp.eq.s32.totalorder %s85, 0
    %s88 = sadd.s32 %s87, 1
    %s89 = scalar_select %p86, %s87, %s88
    %p92 = pneg %p86
    %p93 = scmp.eq.s32.totalorder %s9, 1
    %p94 = por %p92, %p93
    %p95 = scmp.ne.s32.totalorder %s87, %s90
    %p96 = scmp.eq.s32.totalorder %s9, 0
    %p97 = por %p95, %p96
    %p98 = scmp.ne.s32.totalorder %s87, %s90
    %p99 = scmp.eq.s32.totalorder %s14, 1
    %p100 = por %p98, %p99
    %p101 = scmp.ne.s32.totalorder %s90, %s91
    %p102 = scmp.eq.s32.totalorder %s14, 0
    %p103 = por %p101, %p102
    %p104 = scmp.ne.s32.totalorder %s90, %s91
    %p105 = scmp.eq.s32.totalorder %s15, 1
    %p106 = por %p104, %p105
    %p108 = scmp.ne.s32.totalorder %s91, %s107
    %p109 = scmp.eq.s32.totalorder %s15, 0
    %p110 = por %p108, %p109
    %s111 = ssub.s32 %s16, %s28
    %s112 = ssub.s32 %s17, %s24
    %s113 = sor.u32 %s111, %s112
    %p114 = scmp.eq.s32.totalorder %s113, 0
    %s116 = sadd.s32 %s115, 1
    %s117 = scalar_select %p114, %s115, %s116
    %p120 = pneg %p114
    %p121 = scmp.eq.s32.totalorder %s9, 1
    %p122 = por %p120, %p121
    %p123 = scmp.ne.s32.totalorder %s115, %s118
    %p124 = scmp.eq.s32.totalorder %s9, 0
    %p125 = por %p123, %p124
    %p126 = scmp.ne.s32.totalorder %s115, %s118
    %p127 = scmp.eq.s32.totalorder %s14, 1
    %p128 = por %p126, %p127
    %p129 = scmp.ne.s32.totalorder %s118, %s119
    %p130 = scmp.eq.s32.totalorder %s14, 0
    %p131 = por %p129, %p130
    %p132 = scmp.ne.s32.totalorder %s118, %s119
    %p133 = scmp.eq.s32.totalorder %s15, 1
    %p134 = por %p132, %p133
    %p136 = scmp.ne.s32.totalorder %s119, %s135
    %p137 = scmp.eq.s32.totalorder %s15, 0
    %p138 = por %p136, %p137
    %p139 = scmp.le.s32.totalorder 1, %s9
    %p140 = scmp.lt.s32.totalorder %s9, 3
    %p141 = pnand %p139, %p140
    %p142 = pneg %p141
    // Predicated region
    $region9: #{feature_extract_rec_forward.4} parent=5 // pred_check
      _
    $region10: #{feature_extract_rec_forward.4} parent=5 // pred_check_branch
      %144 = sbr.rel (%p141) target = $region12
    $region11: #{feature_extract_rec_forward.4} parent=5 // pred_region
      %s145 = ssub.s32 %s9, 1
    $region12: #{feature_extract_rec_forward.4} parent=5 // pred_fallthru
      _
    %p146 = scmp.lt.s32.totalorder %s9, 2
    // Predicated region
    $region13: #{feature_extract_rec_forward.4} parent=5 // pred_check
      %p147 = pneg %p146
    $region14: #{feature_extract_rec_forward.4} parent=5 // pred_check_branch
      %149 = sbr.rel (%p147) target = $region16
    $region15: #{feature_extract_rec_forward.4} parent=5 // pred_region
      // Predicated region
      $region17: #{feature_extract_rec_forward.4} parent=15 // pred_check
        %p150 = pneg %p43
      $region18: #{feature_extract_rec_forward.4} parent=15 // pred_check_branch
        %152 = sbr.rel (%p150) target = $region20
      $region19: #{feature_extract_rec_forward.4} parent=15 // pred_region
        %p153 = scmp.lt.s32.totalorder %s16, 1
        %s154 = scalar_select %p153, %s16, 1
        %p155 = scmp.lt.s32.totalorder %s17, 0
        %s156 = scalar_select %p155, %s17, 0
        %s157 = sadd.s32 %s156, %s154
        %s158 = smul.addr %s157, 4
        %s159 = scalar_lea.vmem %s0, %s158
      $region20: #{feature_extract_rec_forward.4} parent=15 // pred_fallthru
        _
      // Predicated region
      $region21: #{feature_extract_rec_forward.4} parent=15 // pred_check
        %p160 = pneg %p69
      $region22: #{feature_extract_rec_forward.4} parent=15 // pred_check_branch
        %162 = sbr.rel (%p160) target = $region24
      $region23: #{feature_extract_rec_forward.4} parent=15 // pred_region
        %p163 = scmp.lt.s32.totalorder %s16, 1
        %s164 = scalar_select %p163, %s16, 1
        %s165 = smul.addr %s164, 4
        %s166 = scalar_lea.vmem %s1, %s165
      $region24: #{feature_extract_rec_forward.4} parent=15 // pred_fallthru
        _
      // Predicated region
      $region25: #{feature_extract_rec_forward.4} parent=15 // pred_check
        %p167 = pneg %p97
      $region26: #{feature_extract_rec_forward.4} parent=15 // pred_check_branch
        %169 = sbr.rel (%p167) target = $region28
      $region27: #{feature_extract_rec_forward.4} parent=15 // pred_region
        %s170 = smul.u32 8, %s17
        %p171 = scmp.lt.s32.totalorder %s16, 1
        %s172 = scalar_select %p171, %s16, 1
        %p173 = scmp.lt.s32.totalorder %s170, 7
        %s174 = scalar_select %p173, %s170, 7
        %s175 = smul.addr %s172, 8
        %s176 = sadd.s32 %s174, %s175
        %s177 = smul.addr %s176, 8
        %s178 = scalar_lea.vmem %s2, %s177
        %s179 = smul.u32 8, %s17
      $region28: #{feature_extract_rec_forward.4} parent=15 // pred_fallthru
        _
    $region16: #{feature_extract_rec_forward.4} parent=5 // pred_fallthru
      _
    %p180 = scmp.le.s32.totalorder 1, %s9
    %p181 = scmp.lt.s32.totalorder %s9, 3
    %p182 = pnand %p180, %p181
    %p183 = pneg %p182
    // Predicated region
    $region29: #{feature_extract_rec_forward.4} parent=5 // pred_check
      _
    $region30: #{feature_extract_rec_forward.4} parent=5 // pred_check_branch
      %185 = sbr.rel (%p182) target = $region32
    $region31: #{feature_extract_rec_forward.4} parent=5 // pred_region
      %s186 = ssub.s32 %s9, 1
      %p187 = scmp.lt.s32.totalorder %s18, 1
      %s188 = scalar_select %p187, %s18, 1
      %p189 = scmp.lt.s32.totalorder %s19, 0
      %s190 = scalar_select %p189, %s19, 0
      %s191 = sadd.s32 %s190, %s188
      %s192 = smul.addr %s191, 4
      %s193 = scalar_lea.vmem %s0, %s192
      %p194 = pneg %p49
      %p195 = pneg %p46
      %p196 = scmp.lt.s32.totalorder %s18, 1
      %s197 = scalar_select %p196, %s18, 1
      %s198 = smul.addr %s197, 4
      %s199 = scalar_lea.vmem %s1, %s198
      %p200 = pneg %p75
      %p201 = pneg %p72
      %s202 = smul.u32 8, %s19
      %p203 = scmp.lt.s32.totalorder %s18, 1
      %s204 = scalar_select %p203, %s18, 1
      %p205 = scmp.lt.s32.totalorder %s202, 7
      %s206 = scalar_select %p205, %s202, 7
      %s207 = smul.addr %s204, 8
      %s208 = sadd.s32 %s206, %s207
      %s209 = smul.addr %s208, 8
      %s210 = scalar_lea.vmem %s2, %s209
      %p211 = pneg %p103
      %p212 = pneg %p100
      %p213 = pneg %p131
      %p214 = pneg %p128
      %s215 = smul.u32 8, %s19
      %p216 = scmp.lt.s32.totalorder %s18, 1
      %s217 = scalar_select %p216, %s18, 1
      %p218 = scmp.lt.s32.totalorder %s215, 7
      %s219 = scalar_select %p218, %s215, 7
      %s220 = smul.addr %s217, 8
      %s221 = sadd.s32 %s219, %s220
      %s222 = smul.addr %s221, 8
      %s223 = scalar_lea.vmem %s3, %s222
      %p224 = scmp.lt.s32.totalorder %s18, 1
      %s225 = scalar_select %p224, %s18, 1
      %p226 = scmp.lt.s32.totalorder %s19, 0
      %s227 = scalar_select %p226, %s19, 0
      %s228 = sadd.s32 %s227, %s225
      %s229 = smul.addr %s228, 4
      %s230 = scalar_lea.vmem %s0, %s229
      %p231 = scmp.lt.s32.totalorder %s18, 1
      %s232 = scalar_select %p231, %s18, 1
      %s233 = smul.addr %s232, 4
      %s234 = scalar_lea.vmem %s1, %s233
      %s235 = smul.u32 8, %s19
      %p236 = scmp.lt.s32.totalorder %s18, 1
      %s237 = scalar_select %p236, %s18, 1
      %p238 = scmp.lt.s32.totalorder %s235, 7
      %s239 = scalar_select %p238, %s235, 7
      %s240 = smul.addr %s237, 8
      %s241 = sadd.s32 %s239, %s240
      %s242 = smul.addr %s241, 8
      %s243 = scalar_lea.vmem %s2, %s242
      %s244 = smul.u32 8, %s19
      %s245 = smul.u32 8, %s19
      %p246 = scmp.lt.s32.totalorder %s18, 1
      %s247 = scalar_select %p246, %s18, 1
      %p248 = scmp.lt.s32.totalorder %s245, 7
      %s249 = scalar_select %p248, %s245, 7
      %s250 = smul.addr %s247, 8
      %s251 = sadd.s32 %s249, %s250
      %s252 = smul.addr %s251, 8
      %s253 = scalar_lea.vmem %s3, %s252
      %s254 = smul.u32 8, %s19
      %v255 = vld [vmem:[%s230] sm:$0x7]
      %v256 = vld [vmem:[%s234] sm:$0x7]
      %v257 = vld [vmem:[%s243] sm:$0xff]
      %v258 = vld [vmem:[%s243 + $0x8] sm:$0xff]
      %v259 = vld [vmem:[%s243 + $0x10] sm:$0xff]
      %v260 = vld [vmem:[%s243 + $0x18] sm:$0xff]
      %v261 = vld [vmem:[%s243 + $0x20] sm:$0xff]
      %v262 = vld [vmem:[%s243 + $0x28] sm:$0xff]
      %v263 = vld [vmem:[%s243 + $0x30] sm:$0xff]
      %v264 = vld [vmem:[%s243 + $0x38] sm:$0xff]
      %265 = vxpose.xlu0.b32.start [1/16] %v255, 128
      %266 = vxpose.xlu0.b32.cont [2/16] 0.0, 128
      %267 = vxpose.xlu0.b32.cont [3/16] 0.0, 128
      %268 = vxpose.xlu0.b32.cont [4/16] 0.0, 128
      %269 = vxpose.xlu0.b32.cont [5/16] 0.0, 128
      %270 = vxpose.xlu0.b32.cont [6/16] 0.0, 128
      %271 = vxpose.xlu0.b32.cont [7/16] 0.0, 128
      %272 = vxpose.xlu0.b32.cont [8/16] 0.0, 128
      %273 = vxpose.xlu0.b32.cont [9/16] 0.0, 128
      %274 = vxpose.xlu0.b32.cont [10/16] 0.0, 128
      %275 = vxpose.xlu0.b32.cont [11/16] 0.0, 128
      %276 = vxpose.xlu0.b32.cont [12/16] 0.0, 128
      %277 = vxpose.xlu0.b32.cont [13/16] 0.0, 128
      %278 = vxpose.xlu0.b32.cont [14/16] 0.0, 128
      %279 = vxpose.xlu0.b32.cont [15/16] 0.0, 128
      %280 = vxpose.xlu0.b32.end [16/16] 0.0, 128
      %v281 = vpop.trf.xlu0
      %v282 = vpop.trf.xlu0
      %v283 = vpop.trf.xlu0
      %v284 = vpop.trf.xlu0
      %v285 = vpop.trf.xlu0
      %v286 = vpop.trf.xlu0
      %v287 = vpop.trf.xlu0
      %v288 = vpop.trf.xlu0
      %v289 = vpop.trf.xlu0
      %v290 = vpop.trf.xlu0
      %v291 = vpop.trf.xlu0
      %v292 = vpop.trf.xlu0
      %v293 = vpop.trf.xlu0
      %v294 = vpop.trf.xlu0
      %v295 = vpop.trf.xlu0
      %v296 = vpop.trf.xlu0
      %vm297 = vcmask 23552
      %v299 = vsel %vm297, %v281, 0
      %v302 = vsel %vm297, %v282, 0
      %v305 = vsel %vm297, %v283, 0
      %v308 = vsel %vm297, %v284, 0
      %v311 = vsel %vm297, %v285, 0
      %v314 = vsel %vm297, %v286, 0
      %v317 = vsel %vm297, %v287, 0
      %v320 = vsel %vm297, %v288, 0
      %vm322 = vcmask 1042432
      %v324 = vsel %vm322, %v256, 0
      %326 = vmatprep.subr.mxu0 0.0
      %327 = vmatpush1.msra.mxu0 %v324
      %328 = vmatprep.subr.mxu0 0.0
      %329 = vmatpush1.msra.mxu0 0.0
      %330 = vmatprep.subr.mxu0 0.0
      %331 = vmatpush1.msra.mxu0 0.0
      %332 = vmatprep.subr.mxu0 0.0
      %333 = vmatpush1.msra.mxu0 0.0
      %334 = vmatprep.subr.mxu0 0.0
      %335 = vmatpush1.msra.mxu0 0.0
      %336 = vmatprep.subr.mxu0 0.0
      %337 = vmatpush1.msra.mxu0 0.0
      %338 = vmatprep.subr.mxu0 0.0
      %339 = vmatpush1.msra.mxu0 0.0
      %340 = vmatprep.subr.mxu0 0.0
      %341 = vmatpush1.msra.mxu0 0.0
      %342 = vmatprep.subr.mxu0 0.0
      %343 = vmatpush1.msra.mxu0 0.0
      %344 = vmatprep.subr.mxu0 0.0
      %345 = vmatpush1.msra.mxu0 0.0
      %346 = vmatprep.subr.mxu0 0.0
      %347 = vmatpush1.msra.mxu0 0.0
      %348 = vmatprep.subr.mxu0 0.0
      %349 = vmatpush1.msra.mxu0 0.0
      %350 = vmatprep.subr.mxu0 0.0
      %351 = vmatpush1.msra.mxu0 0.0
      %352 = vmatprep.subr.mxu0 0.0
      %353 = vmatpush1.msra.mxu0 0.0
      %354 = vmatprep.subr.mxu0 0.0
      %355 = vmatpush1.msra.mxu0 0.0
      %356 = vmatprep.subr.mxu0 0.0
      %357 = vmatpush1.msra.mxu0 0.0
      %358 = vmatprep.subr.mxu0 0.0
      %359 = vmatpush1.msra.mxu0 0.0
      %360 = vmatprep.subr.mxu0 0.0
      %361 = vmatpush1.msra.mxu0 0.0
      %362 = vmatprep.subr.mxu0 0.0
      %363 = vmatpush1.msra.mxu0 0.0
      %364 = vmatprep.subr.mxu0 0.0
      %365 = vmatpush1.msra.mxu0 0.0
      %366 = vmatprep.subr.mxu0 0.0
      %367 = vmatpush1.msra.mxu0 0.0
      %368 = vmatprep.subr.mxu0 0.0
      %369 = vmatpush1.msra.mxu0 0.0
      %370 = vmatprep.subr.mxu0 0.0
      %371 = vmatpush1.msra.mxu0 0.0
      %372 = vmatprep.subr.mxu0 0.0
      %373 = vmatpush1.msra.mxu0 0.0
      %374 = vmatprep.subr.mxu0 0.0
      %375 = vmatpush1.msra.mxu0 0.0
      %376 = vmatprep.subr.mxu0 0.0
      %377 = vmatpush1.msra.mxu0 0.0
      %378 = vmatprep.subr.mxu0 0.0
      %379 = vmatpush1.msra.mxu0 0.0
      %380 = vmatprep.subr.mxu0 0.0
      %381 = vmatpush1.msra.mxu0 0.0
      %382 = vmatprep.subr.mxu0 0.0
      %383 = vmatpush1.msra.mxu0 0.0
      %384 = vmatprep.subr.mxu0 0.0
      %385 = vmatpush1.msra.mxu0 0.0
      %386 = vmatprep.subr.mxu0 0.0
      %387 = vmatpush1.msra.mxu0 0.0
      %388 = vmatprep.subr.mxu0 0.0
      %389 = vmatpush1.msra.mxu0 0.0
      %390 = vmatprep.mubr.f32.mxu0 0.0
      %391 = vmatmul.mubr.f32.gmra.mrb[0].mxu0 %v299
      %v392 = vpop.f32.mrb[0].mxu0
      %v393 = vadd.f32 0.0, %v392
      %v394 = vpop.f32.mrb[0].mxu0
      %395 = vmatprep.mubr.f32.mxu0 0.0
      %396 = vmatmul.mubr.f32.gmra.mrb[0].mxu0 %v302
      %v397 = vpop.f32.mrb[0].mxu0
      %v398 = vadd.f32 0.0, %v397
      %v399 = vpop.f32.mrb[0].mxu0
      %400 = vmatprep.mubr.f32.mxu0 0.0
      %401 = vmatmul.mubr.f32.gmra.mrb[0].mxu0 %v305
      %v402 = vpop.f32.mrb[0].mxu0
      %v403 = vadd.f32 0.0, %v402
      %v404 = vpop.f32.mrb[0].mxu0
      %405 = vmatprep.mubr.f32.mxu0 0.0
      %406 = vmatmul.mubr.f32.gmra.mrb[0].mxu0 %v308
      %v407 = vpop.f32.mrb[0].mxu0
      %v408 = vadd.f32 0.0, %v407
      %v409 = vpop.f32.mrb[0].mxu0
      %410 = vmatprep.mubr.f32.mxu0 0.0
      %411 = vmatmul.mubr.f32.gmra.mrb[0].mxu0 %v311
      %v412 = vpop.f32.mrb[0].mxu0
      %v413 = vadd.f32 0.0, %v412
      %v414 = vpop.f32.mrb[0].mxu0
      %415 = vmatprep.mubr.f32.mxu0 0.0
      %416 = vmatmul.mubr.f32.gmra.mrb[0].mxu0 %v314
      %v417 = vpop.f32.mrb[0].mxu0
      %v418 = vadd.f32 0.0, %v417
      %v419 = vpop.f32.mrb[0].mxu0
      %420 = vmatprep.mubr.f32.mxu0 0.0
      %421 = vmatmul.mubr.f32.gmra.mrb[0].mxu0 %v317
      %v422 = vpop.f32.mrb[0].mxu0
      %v423 = vadd.f32 0.0, %v422
      %v424 = vpop.f32.mrb[0].mxu0
      %425 = vmatprep.mubr.f32.mxu0 0.0
      %426 = vmatmul.mubr.f32.gmra.mrb[0].mxu0 %v320
      %v427 = vpop.f32.mrb[0].mxu0
      %v428 = vadd.f32 0.0, %v427
      %v429 = vpop.f32.mrb[0].mxu0
      %430 = vdwg.mxu0
      %v431 = vmul.f32 %v256, %v256
      %vm432 = vcmask 518144
      %v433 = vsel %vm432, %v431, 0.0
      %v434 = vrot.slane %v433, 4
      %v435 = vadd.f32 %v433, %v434
      %v436 = vrot.slane %v435, 2
      %v437 = vadd.f32 %v435, %v436
      %v438 = vrot.slane %v437, 1
      %v439 = vadd.f32 %v437, %v438
      %v440 = vmul.f32 %v393, 2.0
      %v441 = vmul.f32 %v398, 2.0
      %v442 = vmul.f32 %v403, 2.0
      %v443 = vmul.f32 %v408, 2.0
      %v444 = vmul.f32 %v413, 2.0
      %v445 = vmul.f32 %v418, 2.0
      %v446 = vmul.f32 %v423, 2.0
      %v447 = vmul.f32 %v428, 2.0
      %449 = vset.pattern.permute.xlu0 0
      %450 = vperm.xlu0 %449, %v257
      %v451 = vpop.permute.xlu0 %450
      %454 = vset.pattern.permute.xlu0 0
      %455 = vperm.xlu0 %454, %v258
      %v456 = vpop.permute.xlu0 %455
      %459 = vset.pattern.permute.xlu0 0
      %460 = vperm.xlu0 %459, %v259
      %v461 = vpop.permute.xlu0 %460
      %464 = vset.pattern.permute.xlu0 0
      %465 = vperm.xlu0 %464, %v260
      %v466 = vpop.permute.xlu0 %465
      %469 = vset.pattern.permute.xlu0 0
      %470 = vperm.xlu0 %469, %v261
      %v471 = vpop.permute.xlu0 %470
      %474 = vset.pattern.permute.xlu0 0
      %475 = vperm.xlu0 %474, %v262
      %v476 = vpop.permute.xlu0 %475
      %479 = vset.pattern.permute.xlu0 0
      %480 = vperm.xlu0 %479, %v263
      %v481 = vpop.permute.xlu0 %480
      %484 = vset.pattern.permute.xlu0 0
      %485 = vperm.xlu0 %484, %v264
      %v486 = vpop.permute.xlu0 %485
      %v488 = vsub.f32 %v440, %v451
      %v489 = vsub.f32 %v441, %v456
      %v490 = vsub.f32 %v442, %v461
      %v491 = vsub.f32 %v443, %v466
      %v492 = vsub.f32 %v444, %v471
      %v493 = vsub.f32 %v445, %v476
      %v494 = vsub.f32 %v446, %v481
      %v495 = vsub.f32 %v447, %v486
      %v496 = vsub.f32 %v488, %v439
      %v497 = vsub.f32 %v489, %v439
      %v498 = vsub.f32 %v490, %v439
      %v499 = vsub.f32 %v491, %v439
      %v500 = vsub.f32 %v492, %v439
      %v501 = vsub.f32 %v493, %v439
      %v502 = vsub.f32 %v494, %v439
      %v503 = vsub.f32 %v495, %v439
      %vm504 = vcmask 523264
      %505 = vst.msk [vmem:[%s253] sm:$0xff] %vm504, %v496
      %506 = vst.msk [vmem:[%s253 + $0x8] sm:$0xff] %vm504, %v497
      %507 = vst.msk [vmem:[%s253 + $0x10] sm:$0xff] %vm504, %v498
      %508 = vst.msk [vmem:[%s253 + $0x18] sm:$0xff] %vm504, %v499
      %509 = vst.msk [vmem:[%s253 + $0x20] sm:$0xff] %vm504, %v500
      %510 = vst.msk [vmem:[%s253 + $0x28] sm:$0xff] %vm504, %v501
      %511 = vst.msk [vmem:[%s253 + $0x30] sm:$0xff] %vm504, %v502
      %512 = vst.msk [vmem:[%s253 + $0x38] sm:$0xff] %vm504, %v503
      %s513 = smul.u32 8, %s19
      %p514 = scmp.lt.s32.totalorder %s18, 1
      %s515 = scalar_select %p514, %s18, 1
      %p516 = scmp.lt.s32.totalorder %s513, 7
      %s517 = scalar_select %p516, %s513, 7
      %s518 = smul.addr %s515, 8
      %s519 = sadd.s32 %s517, %s518
      %s520 = smul.addr %s519, 8
      %s521 = scalar_lea.vmem %s3, %s520
      // Predicated region
      $region33: #{feature_extract_rec_forward.4} parent=31 // pred_check
        %p522 = pneg %p128
      $region34: #{feature_extract_rec_forward.4} parent=31 // pred_check_branch
        %524 = sbr.rel (%p522) target = $region36
      $region35: #{feature_extract_rec_forward.4} parent=31 // pred_region
        %s525 = smul.u32 8, %s19
      $region36: #{feature_extract_rec_forward.4} parent=31 // pred_fallthru
        _
    $region32: #{feature_extract_rec_forward.4} parent=5 // pred_fallthru
      _
    %p526 = scmp.le.s32.totalorder 2, %s9
    // Predicated region
    $region37: #{feature_extract_rec_forward.4} parent=5 // pred_check
      %p527 = pneg %p526
    $region38: #{feature_extract_rec_forward.4} parent=5 // pred_check_branch
      %529 = sbr.rel (%p527) target = $region40
    $region39: #{feature_extract_rec_forward.4} parent=5 // pred_region
      %s530 = ssub.s32 %s9, 2
      // Predicated region
      $region41: #{feature_extract_rec_forward.4} parent=39 // pred_check
        %p531 = pneg %p134
      $region42: #{feature_extract_rec_forward.4} parent=39 // pred_check_branch
        %533 = sbr.rel (%p531) target = $region44
      $region43: #{feature_extract_rec_forward.4} parent=39 // pred_region
        %s534 = smul.u32 8, %s21
        %p535 = scmp.lt.s32.totalorder %s20, 1
        %s536 = scalar_select %p535, %s20, 1
        %p537 = scmp.lt.s32.totalorder %s534, 7
        %s538 = scalar_select %p537, %s534, 7
        %s539 = smul.addr %s536, 8
        %s540 = sadd.s32 %s538, %s539
        %s541 = smul.addr %s540, 8
        %s542 = scalar_lea.vmem %s3, %s541
      $region44: #{feature_extract_rec_forward.4} parent=39 // pred_fallthru
        _
    $region40: #{feature_extract_rec_forward.4} parent=5 // pred_fallthru
      _
  $region6: #{feature_extract_rec_forward.4} parent=0 // loop_footer
    %s13 = sadd.s32 1, %s9
  $region7: #{feature_extract_rec_forward.4} parent=0 // loop_footer_branch
    %8 = sbr.rel target = $region3
  $region8: #{feature_extract_rec_forward.4} parent=0 // loop_exit
    _

// kernel: feature_extract_rec_forward.5
$region0: #{feature_extract_rec_forward.5}
  #allocation0 [shape = 'u32[]', space=smem, size = 0x4, offset = 0x4, fixed_abs, tag = 'smem constant byte address 0x4 - core index']
  #allocation1 [shape = 'u32[144,128]{1,0:T(1,128)}', space=vmem, size = 0x12000, scoped, tag = 'internal scratch']
  %s0 = inlined_call_operand.vmem [shape: bf16[2,6,1280], index: 0, kind: input, shape index: {}]
  %s1 = inlined_call_operand.vmem [shape: bf16[64,6], index: 1, kind: input, shape index: {}]
  %s2 = inlined_call_operand.vmem [shape: bf16[64,64], index: 2, kind: input, shape index: {}]
  %s3 = inlined_call_operand.vmem [shape: f32[2,64,64], index: 3, kind: output, shape index: {}]
  %s4 = sld [smem:[#allocation0]]
  $region53: #{feature_extract_rec_forward.5} parent=0
    _
  %s6 = ssub.s32 1, %s4
  %s7 = scalar_select 0, %s6, %s4
  loop: start=0, step=1, limit=12
  $region2: #{feature_extract_rec_forward.5} parent=0 // loop_pre_header
    _
  $region3: #{feature_extract_rec_forward.5} parent=0 // loop_header
    %s9 = sphi 0, %s13
    %p10 = scmp.ge.s32.totalorder %s9, 12
    %s16 = sphi 0, %s28
    %s17 = sphi 0, %s24
    %s18 = sphi 0, %s16
    %s19 = sphi 0, %s17
    %s20 = sphi 0, %s18
    %s21 = sphi 0, %s19
    %s33 = sphi 0, %s35
    %s36 = sphi 0, %s33
    %s37 = sphi 0, %s36
    %s53 = sphi 0, %s37
    %s57 = sphi 0, %s57
    %s59 = sphi 0, %s57
    %s60 = sphi 0, %s59
    %s74 = sphi 0, %s60
    %s78 = sphi 0, %s78
    %s80 = sphi 0, %s78
    %s81 = sphi 0, %s80
    %s95 = sphi 0, %s81
    %s101 = sphi 0, %s103
    %s104 = sphi 0, %s101
    %s105 = sphi 0, %s104
    %s121 = sphi 0, %s105
  $region4: #{feature_extract_rec_forward.5} parent=0 // loop_header_branch
    %12 = sbr.rel (%p10) target = $region8
  $region5: #{feature_extract_rec_forward.5} parent=0 // loop_body
    %s14 = ssub.s32 %s9, 1
    %s15 = ssub.s32 %s9, 2
    %s22 = sadd.s32 1, %s17
    %p23 = scmp.ge.s32.totalorder %s22, 5
    %s24 = scalar_select %p23, 0, %s22
    %s25 = sadd.s32 1, %s16
    %s26 = scalar_select %p23, %s25, %s16
    %p27 = scmp.ge.s32.totalorder %s26, 2
    %s28 = scalar_select %p27, 0, %s26
    %s29 = ssub.s32 %s16, %s28
    %s30 = ssub.s32 %s17, %s24
    %s31 = sor.u32 %s29, %s30
    %p32 = scmp.eq.s32.totalorder %s31, 0
    %s34 = sadd.s32 %s33, 1
    %s35 = scalar_select %p32, %s33, %s34
    %p38 = pneg %p32
    %p39 = scmp.eq.s32.totalorder %s9, 9
    %p40 = por %p38, %p39
    %p41 = scmp.ne.s32.totalorder %s33, %s36
    %p42 = scmp.eq.s32.totalorder %s9, 0
    %p43 = por %p41, %p42
    %p44 = scmp.ne.s32.totalorder %s33, %s36
    %p45 = scmp.eq.s32.totalorder %s14, 9
    %p46 = por %p44, %p45
    %p47 = scmp.ne.s32.totalorder %s36, %s37
    %p48 = scmp.eq.s32.totalorder %s14, 0
    %p49 = por %p47, %p48
    %p50 = scmp.ne.s32.totalorder %s36, %s37
    %p51 = scmp.eq.s32.totalorder %s15, 9
    %p52 = por %p50, %p51
    %p54 = scmp.ne.s32.totalorder %s37, %s53
    %p55 = scmp.eq.s32.totalorder %s15, 0
    %p56 = por %p54, %p55
    %s58 = sadd.s32 %s57, 1
    %p61 = scmp.eq.s32.totalorder %s9, 9
    %p62 = scmp.ne.s32.totalorder %s57, %s59
    %p63 = scmp.eq.s32.totalorder %s9, 0
    %p64 = por %p62, %p63
    %p65 = scmp.ne.s32.totalorder %s57, %s59
    %p66 = scmp.eq.s32.totalorder %s14, 9
    %p67 = por %p65, %p66
    %p68 = scmp.ne.s32.totalorder %s59, %s60
    %p69 = scmp.eq.s32.totalorder %s14, 0
    %p70 = por %p68, %p69
    %p71 = scmp.ne.s32.totalorder %s59, %s60
    %p72 = scmp.eq.s32.totalorder %s15, 9
    %p73 = por %p71, %p72
    %p75 = scmp.ne.s32.totalorder %s60, %s74
    %p76 = scmp.eq.s32.totalorder %s15, 0
    %p77 = por %p75, %p76
    %s79 = sadd.s32 %s78, 1
    %p82 = scmp.eq.s32.totalorder %s9, 9
    %p83 = scmp.ne.s32.totalorder %s78, %s80
    %p84 = scmp.eq.s32.totalorder %s9, 0
    %p85 = por %p83, %p84
    %p86 = scmp.ne.s32.totalorder %s78, %s80
    %p87 = scmp.eq.s32.totalorder %s14, 9
    %p88 = por %p86, %p87
    %p89 = scmp.ne.s32.totalorder %s80, %s81
    %p90 = scmp.eq.s32.totalorder %s14, 0
    %p91 = por %p89, %p90
    %p92 = scmp.ne.s32.totalorder %s80, %s81
    %p93 = scmp.eq.s32.totalorder %s15, 9
    %p94 = por %p92, %p93
    %p96 = scmp.ne.s32.totalorder %s81, %s95
    %p97 = scmp.eq.s32.totalorder %s15, 0
    %p98 = por %p96, %p97
    %s99 = ssub.s32 %s16, %s28
    %p100 = scmp.eq.s32.totalorder %s99, 0
    %s102 = sadd.s32 %s101, 1
    %s103 = scalar_select %p100, %s101, %s102
    %p106 = pneg %p100
    %p107 = scmp.eq.s32.totalorder %s9, 9
    %p108 = por %p106, %p107
    %p109 = scmp.ne.s32.totalorder %s101, %s104
    %p110 = scmp.eq.s32.totalorder %s9, 0
    %p111 = por %p109, %p110
    %p112 = scmp.ne.s32.totalorder %s101, %s104
    %p113 = scmp.eq.s32.totalorder %s14, 9
    %p114 = por %p112, %p113
    %p115 = scmp.ne.s32.totalorder %s104, %s105
    %p116 = scmp.eq.s32.totalorder %s14, 0
    %p117 = por %p115, %p116
    %p118 = scmp.ne.s32.totalorder %s104, %s105
    %p119 = scmp.eq.s32.totalorder %s15, 9
    %p120 = por %p118, %p119
    %p122 = scmp.ne.s32.totalorder %s105, %s121
    %p123 = scmp.eq.s32.totalorder %s15, 0
    %p124 = por %p122, %p123
    %p125 = scmp.le.s32.totalorder 1, %s9
    %p126 = scmp.lt.s32.totalorder %s9, 11
    %p127 = pnand %p125, %p126
    %p128 = pneg %p127
    // Predicated region
    $region9: #{feature_extract_rec_forward.5} parent=5 // pred_check
      _
    $region10: #{feature_extract_rec_forward.5} parent=5 // pred_check_branch
      %130 = sbr.rel (%p127) target = $region12
    $region11: #{feature_extract_rec_forward.5} parent=5 // pred_region
      %s131 = ssub.s32 %s9, 1
      // Predicated region
      $region13: #{feature_extract_rec_forward.5} parent=11 // pred_check
        %p132 = pneg %p70
      $region14: #{feature_extract_rec_forward.5} parent=11 // pred_check_branch
        %134 = sbr.rel (%p132) target = $region16
      $region15: #{feature_extract_rec_forward.5} parent=11 // pred_region
        _
      $region16: #{feature_extract_rec_forward.5} parent=11 // pred_fallthru
        _
      // Predicated region
      $region17: #{feature_extract_rec_forward.5} parent=11 // pred_check
        %p135 = pneg %p91
      $region18: #{feature_extract_rec_forward.5} parent=11 // pred_check_branch
        %137 = sbr.rel (%p135) target = $region20
      $region19: #{feature_extract_rec_forward.5} parent=11 // pred_region
        _
      $region20: #{feature_extract_rec_forward.5} parent=11 // pred_fallthru
        _
    $region12: #{feature_extract_rec_forward.5} parent=5 // pred_fallthru
      _
    %p138 = scmp.lt.s32.totalorder %s9, 10
    // Predicated region
    $region21: #{feature_extract_rec_forward.5} parent=5 // pred_check
      %p139 = pneg %p138
    $region22: #{feature_extract_rec_forward.5} parent=5 // pred_check_branch
      %141 = sbr.rel (%p139) target = $region24
    $region23: #{feature_extract_rec_forward.5} parent=5 // pred_region
      // Predicated region
      $region25: #{feature_extract_rec_forward.5} parent=23 // pred_check
        %p142 = pneg %p43
      $region26: #{feature_extract_rec_forward.5} parent=23 // pred_check_branch
        %144 = sbr.rel (%p142) target = $region28
      $region27: #{feature_extract_rec_forward.5} parent=23 // pred_region
        %s145 = smul.u32 2, %s17
        %p146 = scmp.lt.s32.totalorder %s16, 1
        %s147 = scalar_select %p146, %s16, 1
        %p148 = scmp.lt.s32.totalorder %s145, 9
        %s149 = scalar_select %p148, %s145, 9
        %s150 = smul.addr %s147, 10
        %s151 = sadd.s32 %s149, %s150
        %s152 = smul.addr %s151, 4
        %s153 = scalar_lea.vmem %s0, %s152
        %s154 = smul.u32 2, %s17
      $region28: #{feature_extract_rec_forward.5} parent=23 // pred_fallthru
        _
    $region24: #{feature_extract_rec_forward.5} parent=5 // pred_fallthru
      _
    %p155 = scmp.le.s32.totalorder 1, %s9
    %p156 = scmp.lt.s32.totalorder %s9, 11
    %p157 = pnand %p155, %p156
    %p158 = pneg %p157
    // Predicated region
    $region29: #{feature_extract_rec_forward.5} parent=5 // pred_check
      _
    $region30: #{feature_extract_rec_forward.5} parent=5 // pred_check_branch
      %160 = sbr.rel (%p157) target = $region32
    $region31: #{feature_extract_rec_forward.5} parent=5 // pred_region
      %s161 = ssub.s32 %s9, 1
      %s162 = smul.u32 2, %s19
      %p163 = scmp.lt.s32.totalorder %s18, 1
      %s164 = scalar_select %p163, %s18, 1
      %p165 = scmp.lt.s32.totalorder %s162, 9
      %s166 = scalar_select %p165, %s162, 9
      %s167 = smul.addr %s164, 10
      %s168 = sadd.s32 %s166, %s167
      %s169 = smul.addr %s168, 4
      %s170 = scalar_lea.vmem %s0, %s169
      %p171 = pneg %p49
      %p172 = pneg %p46
      %p173 = pneg %p70
      %p174 = pneg %p67
      %p175 = pneg %p91
      %p176 = pneg %p88
      %p177 = pneg %p117
      %p178 = pneg %p114
      %p179 = scmp.lt.s32.totalorder %s18, 1
      %s180 = scalar_select %p179, %s18, 1
      %s181 = smul.addr %s180, 8
      %s182 = smul.addr %s181, 8
      %s183 = scalar_lea.vmem %s3, %s182
      %s184 = smul.u32 2, %s19
      %p185 = scmp.lt.s32.totalorder %s18, 1
      %s186 = scalar_select %p185, %s18, 1
      %p187 = scmp.lt.s32.totalorder %s184, 9
      %s188 = scalar_select %p187, %s184, 9
      %s189 = smul.addr %s186, 10
      %s190 = sadd.s32 %s188, %s189
      %s191 = smul.addr %s190, 4
      %s192 = scalar_lea.vmem %s0, %s191
      %s193 = smul.u32 2, %s19
      %p194 = scmp.lt.s32.totalorder %s18, 1
      %s195 = scalar_select %p194, %s18, 1
      %s196 = smul.addr %s195, 8
      %s197 = smul.addr %s196, 8
      %s198 = scalar_lea.vmem %s3, %s197
      %v200 = vld [vmem:[%s1] sm:$0xf]
      %v201 = vld [vmem:[%s1 + $0x4] sm:$0xf]
      %v202 = vld [vmem:[%s1 + $0x8] sm:$0xf]
      %v203 = vld [vmem:[%s1 + $0xc] sm:$0xf]
      %v204 = vld [vmem:[%s1 + $0x10] sm:$0xf]
      %v205 = vld [vmem:[%s1 + $0x14] sm:$0xf]
      %v206 = vld [vmem:[%s1 + $0x18] sm:$0xf]
      %v207 = vld [vmem:[%s1 + $0x1c] sm:$0xf]
      %v208 = vld [vmem:[%s192] sm:$0x77]
      %v217 = vunpack.c.l.b16 %v200
      %v218 = vunpack.c.l.b16 %v201
      %v219 = vunpack.c.l.b16 %v202
      %v220 = vunpack.c.l.b16 %v203
      %v221 = vunpack.c.l.b16 %v204
      %v222 = vunpack.c.l.b16 %v205
      %v223 = vunpack.c.l.b16 %v206
      %v224 = vunpack.c.l.b16 %v207
      %v225 = vpack.c.b16 %v218, %v217
      %v226 = vpack.c.b16 %v220, %v219
      %v227 = vpack.c.b16 %v222, %v221
      %v228 = vpack.c.b16 %v224, %v223
      %v230 = vunpack.c.l.b16 %v208
      %v231 = vunpack.c.h.b16 %v208
      %v232 = vpack.c.b16 %v230, %v230
      %v233 = vpack.c.b16 %v231, %v231
      %vm234 = vcmask 48128
      %v236 = vsel %vm234, %v225, 0
      %v239 = vsel %vm234, %v226, 0
      %v242 = vsel %vm234, %v227, 0
      %v245 = vsel %vm234, %v228, 0
      %vm247 = vcmask 1042432
      %v249 = vsel %vm247, %v232, 0
      %v252 = vsel %vm247, %v233, 0
      %254 = vmatprep.subr.bf16.mxu0 %v252
      %255 = vmatpush1.bf16.msra.mxu0 %v249
      %256 = vmatprep.subr.bf16.mxu0 0
      %257 = vmatpush1.bf16.msra.mxu0 0
      %258 = vmatprep.subr.bf16.mxu0 0
      %259 = vmatpush1.bf16.msra.mxu0 0
      %260 = vmatprep.subr.bf16.mxu0 0
      %261 = vmatpush1.bf16.msra.mxu0 0
      %262 = vmatprep.subr.bf16.mxu0 0
      %263 = vmatpush1.bf16.msra.mxu0 0
      %264 = vmatprep.subr.bf16.mxu0 0
      %265 = vmatpush1.bf16.msra.mxu0 0
      %266 = vmatprep.subr.bf16.mxu0 0
      %267 = vmatpush1.bf16.msra.mxu0 0
      %268 = vmatprep.subr.bf16.mxu0 0
      %269 = vmatpush1.bf16.msra.mxu0 0
      %270 = vmatprep.subr.bf16.mxu0 0
      %271 = vmatpush1.bf16.msra.mxu0 0
      %272 = vmatprep.subr.bf16.mxu0 0
      %273 = vmatpush1.bf16.msra.mxu0 0
      %274 = vmatprep.subr.bf16.mxu0 0
      %275 = vmatpush1.bf16.msra.mxu0 0
      %276 = vmatprep.subr.bf16.mxu0 0
      %277 = vmatpush1.bf16.msra.mxu0 0
      %278 = vmatprep.subr.bf16.mxu0 0
      %279 = vmatpush1.bf16.msra.mxu0 0
      %280 = vmatprep.subr.bf16.mxu0 0
      %281 = vmatpush1.bf16.msra.mxu0 0
      %282 = vmatprep.subr.bf16.mxu0 0
      %283 = vmatpush1.bf16.msra.mxu0 0
      %284 = vmatprep.subr.bf16.mxu0 0
      %285 = vmatpush1.bf16.msra.mxu0 0
      %286 = vmatprep.mubr.bf16.mxu0 0
      %287 = vmatmul.mubr.bf16.gmra.mrb[0].mxu0 %v236
      %v288 = vpop.f32.mrb[0].mxu0
      %v289 = vadd.f32 0.0, %v288
      %v290 = vpop.f32.mrb[0].mxu0
      %v291 = vadd.f32 0.0, %v290
      %v292 = vpop.f32.mrb[0].mxu0
      %v293 = vadd.f32 0.0, %v292
      %v294 = vpop.f32.mrb[0].mxu0
      %v295 = vadd.f32 0.0, %v294
      %296 = vmatprep.mubr.bf16.mxu0 0
      %297 = vmatmul.mubr.bf16.gmra.mrb[0].mxu0 %v239
      %v298 = vpop.f32.mrb[0].mxu0
      %v299 = vadd.f32 0.0, %v298
      %v300 = vpop.f32.mrb[0].mxu0
      %v301 = vadd.f32 0.0, %v300
      %v302 = vpop.f32.mrb[0].mxu0
      %v303 = vadd.f32 0.0, %v302
      %v304 = vpop.f32.mrb[0].mxu0
      %v305 = vadd.f32 0.0, %v304
      %306 = vmatprep.mubr.bf16.mxu0 0
      %307 = vmatmul.mubr.bf16.gmra.mrb[0].mxu0 %v242
      %v308 = vpop.f32.mrb[0].mxu0
      %v309 = vadd.f32 0.0, %v308
      %v310 = vpop.f32.mrb[0].mxu0
      %v311 = vadd.f32 0.0, %v310
      %v312 = vpop.f32.mrb[0].mxu0
      %v313 = vadd.f32 0.0, %v312
      %v314 = vpop.f32.mrb[0].mxu0
      %v315 = vadd.f32 0.0, %v314
      %316 = vmatprep.mubr.bf16.mxu0 0
      %317 = vmatmul.mubr.bf16.gmra.mrb[0].mxu0 %v245
      %v318 = vpop.f32.mrb[0].mxu0
      %v319 = vadd.f32 0.0, %v318
      %v320 = vpop.f32.mrb[0].mxu0
      %v321 = vadd.f32 0.0, %v320
      %v322 = vpop.f32.mrb[0].mxu0
      %v323 = vadd.f32 0.0, %v322
      %v324 = vpop.f32.mrb[0].mxu0
      %v325 = vadd.f32 0.0, %v324
      %326 = vdwg.mxu0
      %vm327 = vcmp.ge.f32.partialorder %v289, 0.0
      %vm328 = vcmp.ge.f32.partialorder %v291, 0.0
      %vm329 = vcmp.ge.f32.partialorder %v293, 0.0
      %vm330 = vcmp.ge.f32.partialorder %v295, 0.0
      %vm331 = vcmp.ge.f32.partialorder %v299, 0.0
      %vm332 = vcmp.ge.f32.partialorder %v301, 0.0
      %vm333 = vcmp.ge.f32.partialorder %v303, 0.0
      %vm334 = vcmp.ge.f32.partialorder %v305, 0.0
      %vm335 = vcmp.ge.f32.partialorder %v309, 0.0
      %vm336 = vcmp.ge.f32.partialorder %v311, 0.0
      %vm337 = vcmp.ge.f32.partialorder %v313, 0.0
      %vm338 = vcmp.ge.f32.partialorder %v315, 0.0
      %vm339 = vcmp.ge.f32.partialorder %v319, 0.0
      %vm340 = vcmp.ge.f32.partialorder %v321, 0.0
      %vm341 = vcmp.ge.f32.partialorder %v323, 0.0
      %vm342 = vcmp.ge.f32.partialorder %v325, 0.0
      %v343 = vmul.f32 %v289, 0.2
      %v344 = vmul.f32 %v291, 0.2
      %v345 = vmul.f32 %v293, 0.2
      %v346 = vmul.f32 %v295, 0.2
      %v347 = vmul.f32 %v299, 0.2
      %v348 = vmul.f32 %v301, 0.2
      %v349 = vmul.f32 %v303, 0.2
      %v350 = vmul.f32 %v305, 0.2
      %v351 = vmul.f32 %v309, 0.2
      %v352 = vmul.f32 %v311, 0.2
      %v353 = vmul.f32 %v313, 0.2
      %v354 = vmul.f32 %v315, 0.2
      %v355 = vmul.f32 %v319, 0.2
      %v356 = vmul.f32 %v321, 0.2
      %v357 = vmul.f32 %v323, 0.2
      %v358 = vmul.f32 %v325, 0.2
      %v359 = vsel %vm327, %v289, %v343
      %v360 = vsel %vm328, %v291, %v344
      %v361 = vsel %vm329, %v293, %v345
      %v362 = vsel %vm330, %v295, %v346
      %v363 = vsel %vm331, %v299, %v347
      %v364 = vsel %vm332, %v301, %v348
      %v365 = vsel %vm333, %v303, %v349
      %v366 = vsel %vm334, %v305, %v350
      %v367 = vsel %vm335, %v309, %v351
      %v368 = vsel %vm336, %v311, %v352
      %v369 = vsel %vm337, %v313, %v353
      %v370 = vsel %vm338, %v315, %v354
      %v371 = vsel %vm339, %v319, %v355
      %v372 = vsel %vm340, %v321, %v356
      %v373 = vsel %vm341, %v323, %v357
      %v374 = vsel %vm342, %v325, %v358
      %v375 = vld [vmem:[%s2] sm:$0xf]
      %v376 = vld [vmem:[%s2 + $0x4] sm:$0xf]
      %v377 = vld [vmem:[%s2 + $0x8] sm:$0xf]
      %v378 = vld [vmem:[%s2 + $0xc] sm:$0xf]
      %v379 = vld [vmem:[%s2 + $0x10] sm:$0xf]
      %v380 = vld [vmem:[%s2 + $0x14] sm:$0xf]
      %v381 = vld [vmem:[%s2 + $0x18] sm:$0xf]
      %v382 = vld [vmem:[%s2 + $0x1c] sm:$0xf]
      %v383 = vpack.c.bf16 %v361, %v359
      %v384 = vpack.c.bf16 %v362, %v360
      %v385 = vpack.c.bf16 %v365, %v363
      %v386 = vpack.c.bf16 %v366, %v364
      %v387 = vpack.c.bf16 %v369, %v367
      %v388 = vpack.c.bf16 %v370, %v368
      %v389 = vpack.c.bf16 %v373, %v371
      %v390 = vpack.c.bf16 %v374, %v372
      %v399 = vunpack.c.l.b16 %v375
      %v400 = vunpack.c.l.b16 %v376
      %v401 = vunpack.c.l.b16 %v377
      %v402 = vunpack.c.l.b16 %v378
      %v403 = vunpack.c.l.b16 %v379
      %v404 = vunpack.c.l.b16 %v380
      %v405 = vunpack.c.l.b16 %v381
      %v406 = vunpack.c.l.b16 %v382
      %v407 = vpack.c.b16 %v400, %v399
      %v408 = vpack.c.b16 %v402, %v401
      %v409 = vpack.c.b16 %v404, %v403
      %v410 = vpack.c.b16 %v406, %v405
      %vm411 = vcmask 523264
      %v413 = vsel %vm411, %v407, 0
      %v416 = vsel %vm411, %v408, 0
      %v419 = vsel %vm411, %v409, 0
      %v422 = vsel %vm411, %v410, 0
      %424 = vmatprep.subr.bf16.mxu0 %v384
      %425 = vmatpush1.bf16.msra.mxu0 %v383
      %426 = vmatprep.subr.bf16.mxu0 %v386
      %427 = vmatpush1.bf16.msra.mxu0 %v385
      %428 = vmatprep.subr.bf16.mxu0 %v388
      %429 = vmatpush1.bf16.msra.mxu0 %v387
      %430 = vmatprep.subr.bf16.mxu0 %v390
      %431 = vmatpush1.bf16.msra.mxu0 %v389
      %432 = vmatprep.subr.bf16.mxu0 0
      %433 = vmatpush1.bf16.msra.mxu0 0
      %434 = vmatprep.subr.bf16.mxu0 0
      %435 = vmatpush1.bf16.msra.mxu0 0
      %436 = vmatprep.subr.bf16.mxu0 0
      %437 = vmatpush1.bf16.msra.mxu0 0
      %438 = vmatprep.subr.bf16.mxu0 0
      %439 = vmatpush1.bf16.msra.mxu0 0
      %440 = vmatprep.subr.bf16.mxu0 0
      %441 = vmatpush1.bf16.msra.mxu0 0
      %442 = vmatprep.subr.bf16.mxu0 0
      %443 = vmatpush1.bf16.msra.mxu0 0
      %444 = vmatprep.subr.bf16.mxu0 0
      %445 = vmatpush1.bf16.msra.mxu0 0
      %446 = vmatprep.subr.bf16.mxu0 0
      %447 = vmatpush1.bf16.msra.mxu0 0
      %448 = vmatprep.subr.bf16.mxu0 0
      %449 = vmatpush1.bf16.msra.mxu0 0
      %450 = vmatprep.subr.bf16.mxu0 0
      %451 = vmatpush1.bf16.msra.mxu0 0
      %452 = vmatprep.subr.bf16.mxu0 0
      %453 = vmatpush1.bf16.msra.mxu0 0
      %454 = vmatprep.subr.bf16.mxu0 0
      %455 = vmatpush1.bf16.msra.mxu0 0
      %456 = vmatprep.mubr.bf16.mxu0 0
      %457 = vmatmul.mubr.bf16.gmra.mrb[0].mxu0 %v413
      %v458 = vpop.f32.mrb[0].mxu0
      %v459 = vadd.f32 0.0, %v458
      %v460 = vpop.f32.mrb[0].mxu0
      %v461 = vadd.f32 0.0, %v460
      %v462 = vpop.f32.mrb[0].mxu0
      %v463 = vadd.f32 0.0, %v462
      %v464 = vpop.f32.mrb[0].mxu0
      %v465 = vadd.f32 0.0, %v464
      %466 = vmatprep.mubr.bf16.mxu0 0
      %467 = vmatmul.mubr.bf16.gmra.mrb[0].mxu0 %v416
      %v468 = vpop.f32.mrb[0].mxu0
      %v469 = vadd.f32 0.0, %v468
      %v470 = vpop.f32.mrb[0].mxu0
      %v471 = vadd.f32 0.0, %v470
      %v472 = vpop.f32.mrb[0].mxu0
      %v473 = vadd.f32 0.0, %v472
      %v474 = vpop.f32.mrb[0].mxu0
      %v475 = vadd.f32 0.0, %v474
      %476 = vmatprep.mubr.bf16.mxu0 0
      %477 = vmatmul.mubr.bf16.gmra.mrb[0].mxu0 %v419
      %v478 = vpop.f32.mrb[0].mxu0
      %v479 = vadd.f32 0.0, %v478
      %v480 = vpop.f32.mrb[0].mxu0
      %v481 = vadd.f32 0.0, %v480
      %v482 = vpop.f32.mrb[0].mxu0
      %v483 = vadd.f32 0.0, %v482
      %v484 = vpop.f32.mrb[0].mxu0
      %v485 = vadd.f32 0.0, %v484
      %486 = vmatprep.mubr.bf16.mxu0 0
      %487 = vmatmul.mubr.bf16.gmra.mrb[0].mxu0 %v422
      %v488 = vpop.f32.mrb[0].mxu0
      %v489 = vadd.f32 0.0, %v488
      %v490 = vpop.f32.mrb[0].mxu0
      %v491 = vadd.f32 0.0, %v490
      %v492 = vpop.f32.mrb[0].mxu0
      %v493 = vadd.f32 0.0, %v492
      %v494 = vpop.f32.mrb[0].mxu0
      %v495 = vadd.f32 0.0, %v494
      %496 = vdwg.mxu0
      %vm497 = vcmp.ge.f32.partialorder %v459, 0.0
      %vm498 = vcmp.ge.f32.partialorder %v461, 0.0
      %vm499 = vcmp.ge.f32.partialorder %v463, 0.0
      %vm500 = vcmp.ge.f32.partialorder %v465, 0.0
      %vm501 = vcmp.ge.f32.partialorder %v469, 0.0
      %vm502 = vcmp.ge.f32.partialorder %v471, 0.0
      %vm503 = vcmp.ge.f32.partialorder %v473, 0.0
      %vm504 = vcmp.ge.f32.partialorder %v475, 0.0
      %vm505 = vcmp.ge.f32.partialorder %v479, 0.0
      %vm506 = vcmp.ge.f32.partialorder %v481, 0.0
      %vm507 = vcmp.ge.f32.partialorder %v483, 0.0
      %vm508 = vcmp.ge.f32.partialorder %v485, 0.0
      %vm509 = vcmp.ge.f32.partialorder %v489, 0.0
      %vm510 = vcmp.ge.f32.partialorder %v491, 0.0
      %vm511 = vcmp.ge.f32.partialorder %v493, 0.0
      %vm512 = vcmp.ge.f32.partialorder %v495, 0.0
      %v513 = vmul.f32 %v459, 0.2
      %v514 = vmul.f32 %v461, 0.2
      %v515 = vmul.f32 %v463, 0.2
      %v516 = vmul.f32 %v465, 0.2
      %v517 = vmul.f32 %v469, 0.2
      %v518 = vmul.f32 %v471, 0.2
      %v519 = vmul.f32 %v473, 0.2
      %v520 = vmul.f32 %v475, 0.2
      %v521 = vmul.f32 %v479, 0.2
      %v522 = vmul.f32 %v481, 0.2
      %v523 = vmul.f32 %v483, 0.2
      %v524 = vmul.f32 %v485, 0.2
      %v525 = vmul.f32 %v489, 0.2
      %v526 = vmul.f32 %v491, 0.2
      %v527 = vmul.f32 %v493, 0.2
      %v528 = vmul.f32 %v495, 0.2
      %v529 = vsel %vm497, %v459, %v513
      %v530 = vsel %vm498, %v461, %v514
      %v531 = vsel %vm499, %v463, %v515
      %v532 = vsel %vm500, %v465, %v516
      %v533 = vsel %vm501, %v469, %v517
      %v534 = vsel %vm502, %v471, %v518
      %v535 = vsel %vm503, %v473, %v519
      %v536 = vsel %vm504, %v475, %v520
      %v537 = vsel %vm505, %v479, %v521
      %v538 = vsel %vm506, %v481, %v522
      %v539 = vsel %vm507, %v483, %v523
      %v540 = vsel %vm508, %v485, %v524
      %v541 = vsel %vm509, %v489, %v525
      %v542 = vsel %vm510, %v491, %v526
      %v543 = vsel %vm511, %v493, %v527
      %v544 = vsel %vm512, %v495, %v528
      %553 = vrot.lane.b32.xlu0 %v529, 64
      %v554 = vpop.permute.xlu0 %553
      %555 = vrot.lane.b32.xlu0 %v531, 64
      %v556 = vpop.permute.xlu0 %555
      %557 = vrot.lane.b32.xlu0 %v533, 64
      %v558 = vpop.permute.xlu0 %557
      %559 = vrot.lane.b32.xlu0 %v535, 64
      %v560 = vpop.permute.xlu0 %559
      %561 = vrot.lane.b32.xlu0 %v537, 64
      %v562 = vpop.permute.xlu0 %561
      %563 = vrot.lane.b32.xlu0 %v539, 64
      %v564 = vpop.permute.xlu0 %563
      %565 = vrot.lane.b32.xlu0 %v541, 64
      %v566 = vpop.permute.xlu0 %565
      %567 = vrot.lane.b32.xlu0 %v543, 64
      %v568 = vpop.permute.xlu0 %567
      %v577 = vmax.f32 %v529, %v554
      %v578 = vmax.f32 %v531, %v556
      %v579 = vmax.f32 %v533, %v558
      %v580 = vmax.f32 %v535, %v560
      %v581 = vmax.f32 %v537, %v562
      %v582 = vmax.f32 %v539, %v564
      %v583 = vmax.f32 %v541, %v566
      %v584 = vmax.f32 %v543, %v568
      %v585 = vmax.f32 %v577, %v530
      %v586 = vmax.f32 %v578, %v532
      %v587 = vmax.f32 %v579, %v534
      %v588 = vmax.f32 %v580, %v536
      %v589 = vmax.f32 %v581, %v538
      %v590 = vmax.f32 %v582, %v540
      %v591 = vmax.f32 %v583, %v542
      %v592 = vmax.f32 %v584, %v544
      %601 = vrot.lane.b32.xlu0 %v530, 64
      %v602 = vpop.permute.xlu0 %601
      %603 = vrot.lane.b32.xlu0 %v532, 64
      %v604 = vpop.permute.xlu0 %603
      %605 = vrot.lane.b32.xlu0 %v534, 64
      %v606 = vpop.permute.xlu0 %605
      %607 = vrot.lane.b32.xlu0 %v536, 64
      %v608 = vpop.permute.xlu0 %607
      %609 = vrot.lane.b32.xlu0 %v538, 64
      %v610 = vpop.permute.xlu0 %609
      %611 = vrot.lane.b32.xlu0 %v540, 64
      %v612 = vpop.permute.xlu0 %611
      %613 = vrot.lane.b32.xlu0 %v542, 64
      %v614 = vpop.permute.xlu0 %613
      %615 = vrot.lane.b32.xlu0 %v544, 64
      %v616 = vpop.permute.xlu0 %615
      %v625 = vmax.f32 %v585, %v602
      %v626 = vmax.f32 %v586, %v604
      %v627 = vmax.f32 %v587, %v606
      %v628 = vmax.f32 %v588, %v608
      %v629 = vmax.f32 %v589, %v610
      %v630 = vmax.f32 %v590, %v612
      %v631 = vmax.f32 %v591, %v614
      %v632 = vmax.f32 %v592, %v616
      %p633 = scmp.eq.s32.totalorder %s19, 0
      // Predicated region
      $region33: #{feature_extract_rec_forward.5} parent=31 // pred_check
        %p634 = pneg %p633
      $region34: #{feature_extract_rec_forward.5} parent=31 // pred_check_branch
        %636 = sbr.rel (%p634) target = $region36
      $region35: #{feature_extract_rec_forward.5} parent=31 // pred_region
        %637 = vst.msk [vmem:[%s198] sm:$0xff] %vm411, %v625
        %638 = vst.msk [vmem:[%s198 + $0x8] sm:$0xff] %vm411, %v626
        %639 = vst.msk [vmem:[%s198 + $0x10] sm:$0xff] %vm411, %v627
        %640 = vst.msk [vmem:[%s198 + $0x18] sm:$0xff] %vm411, %v628
        %641 = vst.msk [vmem:[%s198 + $0x20] sm:$0xff] %vm411, %v629
        %642 = vst.msk [vmem:[%s198 + $0x28] sm:$0xff] %vm411, %v630
        %643 = vst.msk [vmem:[%s198 + $0x30] sm:$0xff] %vm411, %v631
        %644 = vst.msk [vmem:[%s198 + $0x38] sm:$0xff] %vm411, %v632
      $region36: #{feature_extract_rec_forward.5} parent=31 // pred_fallthru
        _
      %p645 = scmp.gt.s32.totalorder %s19, 0
      // Predicated region
      $region37: #{feature_extract_rec_forward.5} parent=31 // pred_check
        %p646 = pneg %p645
      $region38: #{feature_extract_rec_forward.5} parent=31 // pred_check_branch
        %648 = sbr.rel (%p646) target = $region40
      $region39: #{feature_extract_rec_forward.5} parent=31 // pred_region
        %v649 = vld [vmem:[%s198] sm:$0xff]
        %v650 = vld [vmem:[%s198 + $0x8] sm:$0xff]
        %v651 = vld [vmem:[%s198 + $0x10] sm:$0xff]
        %v652 = vld [vmem:[%s198 + $0x18] sm:$0xff]
        %v653 = vld [vmem:[%s198 + $0x20] sm:$0xff]
        %v654 = vld [vmem:[%s198 + $0x28] sm:$0xff]
        %v655 = vld [vmem:[%s198 + $0x30] sm:$0xff]
        %v656 = vld [vmem:[%s198 + $0x38] sm:$0xff]
        %v657 = vmax.f32 %v649, %v625
        %v658 = vmax.f32 %v650, %v626
        %v659 = vmax.f32 %v651, %v627
        %v660 = vmax.f32 %v652, %v628
        %v661 = vmax.f32 %v653, %v629
        %v662 = vmax.f32 %v654, %v630
        %v663 = vmax.f32 %v655, %v631
        %v664 = vmax.f32 %v656, %v632
        %665 = vst.msk [vmem:[%s198] sm:$0xff] %vm411, %v657
        %666 = vst.msk [vmem:[%s198 + $0x8] sm:$0xff] %vm411, %v658
        %667 = vst.msk [vmem:[%s198 + $0x10] sm:$0xff] %vm411, %v659
        %668 = vst.msk [vmem:[%s198 + $0x18] sm:$0xff] %vm411, %v660
        %669 = vst.msk [vmem:[%s198 + $0x20] sm:$0xff] %vm411, %v661
        %670 = vst.msk [vmem:[%s198 + $0x28] sm:$0xff] %vm411, %v662
        %671 = vst.msk [vmem:[%s198 + $0x30] sm:$0xff] %vm411, %v663
        %672 = vst.msk [vmem:[%s198 + $0x38] sm:$0xff] %vm411, %v664
      $region40: #{feature_extract_rec_forward.5} parent=31 // pred_fallthru
        _
      %p673 = scmp.lt.s32.totalorder %s18, 1
      %s674 = scalar_select %p673, %s18, 1
      %s675 = smul.addr %s674, 8
      %s676 = smul.addr %s675, 8
      %s677 = scalar_lea.vmem %s3, %s676
      // Predicated region
      $region41: #{feature_extract_rec_forward.5} parent=31 // pred_check
        %p678 = pneg %p114
      $region42: #{feature_extract_rec_forward.5} parent=31 // pred_check_branch
        %680 = sbr.rel (%p678) target = $region44
      $region43: #{feature_extract_rec_forward.5} parent=31 // pred_region
        _
      $region44: #{feature_extract_rec_forward.5} parent=31 // pred_fallthru
        _
    $region32: #{feature_extract_rec_forward.5} parent=5 // pred_fallthru
      _
    %p681 = scmp.le.s32.totalorder 2, %s9
    // Predicated region
    $region45: #{feature_extract_rec_forward.5} parent=5 // pred_check
      %p682 = pneg %p681
    $region46: #{feature_extract_rec_forward.5} parent=5 // pred_check_branch
      %684 = sbr.rel (%p682) target = $region48
    $region47: #{feature_extract_rec_forward.5} parent=5 // pred_region
      %s685 = ssub.s32 %s9, 2
      // Predicated region
      $region49: #{feature_extract_rec_forward.5} parent=47 // pred_check
        %p686 = pneg %p120
      $region50: #{feature_extract_rec_forward.5} parent=47 // pred_check_branch
        %688 = sbr.rel (%p686) target = $region52
      $region51: #{feature_extract_rec_forward.5} parent=47 // pred_region
        %p689 = scmp.lt.s32.totalorder %s20, 1
        %s690 = scalar_select %p689, %s20, 1
        %s691 = smul.addr %s690, 8
        %s692 = smul.addr %s691, 8
        %s693 = scalar_lea.vmem %s3, %s692
      $region52: #{feature_extract_rec_forward.5} parent=47 // pred_fallthru
        _
    $region48: #{feature_extract_rec_forward.5} parent=5 // pred_fallthru
      _
  $region6: #{feature_extract_rec_forward.5} parent=0 // loop_footer
    %s13 = sadd.s32 1, %s9
  $region7: #{feature_extract_rec_forward.5} parent=0 // loop_footer_branch
    %8 = sbr.rel target = $region3
  $region8: #{feature_extract_rec_forward.5} parent=0 // loop_exit
    _

// kernel: feature_extract_rec_forward.6
$region0: #{feature_extract_rec_forward.6}
  #allocation0 [shape = 'u32[]', space=smem, size = 0x4, offset = 0x4, fixed_abs, tag = 'smem constant byte address 0x4 - core index']
  #allocation1 [shape = 'u32[144,128]{1,0:T(1,128)}', space=vmem, size = 0x12000, scoped, tag = 'internal scratch']
  %s0 = inlined_call_operand.vmem [shape: f32[2,64,64], index: 0, kind: input, shape index: {}, may-alias: {0,1}]
  %s1 = inlined_call_operand.vmem [shape: f32[2,64,64], index: 1, kind: input, shape index: {}, may-alias: {0,1}]
  %s2 = inlined_call_operand.vmem [shape: f32[2,64,1], index: 2, kind: input, shape index: {}]
  %s3 = inlined_call_operand.vmem [shape: f32[2,64,64], index: 3, kind: output, shape index: {}]
  %s4 = sld [smem:[#allocation0]]
  $region45: #{feature_extract_rec_forward.6} parent=0
    _
  %s6 = ssub.s32 1, %s4
  %s7 = scalar_select 0, %s6, %s4
  loop: start=0, step=1, limit=4
  $region2: #{feature_extract_rec_forward.6} parent=0 // loop_pre_header
    _
  $region3: #{feature_extract_rec_forward.6} parent=0 // loop_header
    %s9 = sphi 0, %s13
    %p10 = scmp.ge.s32.totalorder %s9, 4
    %s16 = sphi 0, %s28
    %s17 = sphi 0, %s24
    %s18 = sphi 0, %s16
    %s19 = sphi 0, %s17
    %s20 = sphi 0, %s18
    %s21 = sphi 0, %s19
    %s33 = sphi 0, %s35
    %s36 = sphi 0, %s33
    %s37 = sphi 0, %s36
    %s53 = sphi 0, %s37
    %s59 = sphi 0, %s61
    %s62 = sphi 0, %s59
    %s63 = sphi 0, %s62
    %s79 = sphi 0, %s63
    %s87 = sphi 0, %s89
    %s90 = sphi 0, %s87
    %s91 = sphi 0, %s90
    %s107 = sphi 0, %s91
    %s115 = sphi 0, %s117
    %s118 = sphi 0, %s115
    %s119 = sphi 0, %s118
    %s135 = sphi 0, %s119
  $region4: #{feature_extract_rec_forward.6} parent=0 // loop_header_branch
    %12 = sbr.rel (%p10) target = $region8
  $region5: #{feature_extract_rec_forward.6} parent=0 // loop_body
    %s14 = ssub.s32 %s9, 1
    %s15 = ssub.s32 %s9, 2
    %s22 = sadd.s32 1, %s17
    %p23 = scmp.ge.s32.totalorder %s22, 1
    %s24 = scalar_select %p23, 0, %s22
    %s25 = sadd.s32 1, %s16
    %s26 = scalar_select %p23, %s25, %s16
    %p27 = scmp.ge.s32.totalorder %s26, 2
    %s28 = scalar_select %p27, 0, %s26
    %s29 = ssub.s32 %s16, %s28
    %s30 = ssub.s32 %s17, %s24
    %s31 = sor.u32 %s29, %s30
    %p32 = scmp.eq.s32.totalorder %s31, 0
    %s34 = sadd.s32 %s33, 1
    %s35 = scalar_select %p32, %s33, %s34
    %p38 = pneg %p32
    %p39 = scmp.eq.s32.totalorder %s9, 1
    %p40 = por %p38, %p39
    %p41 = scmp.ne.s32.totalorder %s33, %s36
    %p42 = scmp.eq.s32.totalorder %s9, 0
    %p43 = por %p41, %p42
    %p44 = scmp.ne.s32.totalorder %s33, %s36
    %p45 = scmp.eq.s32.totalorder %s14, 1
    %p46 = por %p44, %p45
    %p47 = scmp.ne.s32.totalorder %s36, %s37
    %p48 = scmp.eq.s32.totalorder %s14, 0
    %p49 = por %p47, %p48
    %p50 = scmp.ne.s32.totalorder %s36, %s37
    %p51 = scmp.eq.s32.totalorder %s15, 1
    %p52 = por %p50, %p51
    %p54 = scmp.ne.s32.totalorder %s37, %s53
    %p55 = scmp.eq.s32.totalorder %s15, 0
    %p56 = por %p54, %p55
    %s57 = ssub.s32 %s16, %s28
    %p58 = scmp.eq.s32.totalorder %s57, 0
    %s60 = sadd.s32 %s59, 1
    %s61 = scalar_select %p58, %s59, %s60
    %p64 = pneg %p58
    %p65 = scmp.eq.s32.totalorder %s9, 1
    %p66 = por %p64, %p65
    %p67 = scmp.ne.s32.totalorder %s59, %s62
    %p68 = scmp.eq.s32.totalorder %s9, 0
    %p69 = por %p67, %p68
    %p70 = scmp.ne.s32.totalorder %s59, %s62
    %p71 = scmp.eq.s32.totalorder %s14, 1
    %p72 = por %p70, %p71
    %p73 = scmp.ne.s32.totalorder %s62, %s63
    %p74 = scmp.eq.s32.totalorder %s14, 0
    %p75 = por %p73, %p74
    %p76 = scmp.ne.s32.totalorder %s62, %s63
    %p77 = scmp.eq.s32.totalorder %s15, 1
    %p78 = por %p76, %p77
    %p80 = scmp.ne.s32.totalorder %s63, %s79
    %p81 = scmp.eq.s32.totalorder %s15, 0
    %p82 = por %p80, %p81
    %s83 = ssub.s32 %s16, %s28
    %s84 = ssub.s32 %s17, %s24
    %s85 = sor.u32 %s83, %s84
    %p86 = scmp.eq.s32.totalorder %s85, 0
    %s88 = sadd.s32 %s87, 1
    %s89 = scalar_select %p86, %s87, %s88
    %p92 = pneg %p86
    %p93 = scmp.eq.s32.totalorder %s9, 1
    %p94 = por %p92, %p93
    %p95 = scmp.ne.s32.totalorder %s87, %s90
    %p96 = scmp.eq.s32.totalorder %s9, 0
    %p97 = por %p95, %p96
    %p98 = scmp.ne.s32.totalorder %s87, %s90
    %p99 = scmp.eq.s32.totalorder %s14, 1
    %p100 = por %p98, %p99
    %p101 = scmp.ne.s32.totalorder %s90, %s91
    %p102 = scmp.eq.s32.totalorder %s14, 0
    %p103 = por %p101, %p102
    %p104 = scmp.ne.s32.totalorder %s90, %s91
    %p105 = scmp.eq.s32.totalorder %s15, 1
    %p106 = por %p104, %p105
    %p108 = scmp.ne.s32.totalorder %s91, %s107
    %p109 = scmp.eq.s32.totalorder %s15, 0
    %p110 = por %p108, %p109
    %s111 = ssub.s32 %s16, %s28
    %s112 = ssub.s32 %s17, %s24
    %s113 = sor.u32 %s111, %s112
    %p114 = scmp.eq.s32.totalorder %s113, 0
    %s116 = sadd.s32 %s115, 1
    %s117 = scalar_select %p114, %s115, %s116
    %p120 = pneg %p114
    %p121 = scmp.eq.s32.totalorder %s9, 1
    %p122 = por %p120, %p121
    %p123 = scmp.ne.s32.totalorder %s115, %s118
    %p124 = scmp.eq.s32.totalorder %s9, 0
    %p125 = por %p123, %p124
    %p126 = scmp.ne.s32.totalorder %s115, %s118
    %p127 = scmp.eq.s32.totalorder %s14, 1
    %p128 = por %p126, %p127
    %p129 = scmp.ne.s32.totalorder %s118, %s119
    %p130 = scmp.eq.s32.totalorder %s14, 0
    %p131 = por %p129, %p130
    %p132 = scmp.ne.s32.totalorder %s118, %s119
    %p133 = scmp.eq.s32.totalorder %s15, 1
    %p134 = por %p132, %p133
    %p136 = scmp.ne.s32.totalorder %s119, %s135
    %p137 = scmp.eq.s32.totalorder %s15, 0
    %p138 = por %p136, %p137
    %p139 = scmp.le.s32.totalorder 1, %s9
    %p140 = scmp.lt.s32.totalorder %s9, 3
    %p141 = pnand %p139, %p140
    %p142 = pneg %p141
    // Predicated region
    $region9: #{feature_extract_rec_forward.6} parent=5 // pred_check
      _
    $region10: #{feature_extract_rec_forward.6} parent=5 // pred_check_branch
      %144 = sbr.rel (%p141) target = $region12
    $region11: #{feature_extract_rec_forward.6} parent=5 // pred_region
      %s145 = ssub.s32 %s9, 1
    $region12: #{feature_extract_rec_forward.6} parent=5 // pred_fallthru
      _
    %p146 = scmp.lt.s32.totalorder %s9, 2
    // Predicated region
    $region13: #{feature_extract_rec_forward.6} parent=5 // pred_check
      %p147 = pneg %p146
    $region14: #{feature_extract_rec_forward.6} parent=5 // pred_check_branch
      %149 = sbr.rel (%p147) target = $region16
    $region15: #{feature_extract_rec_forward.6} parent=5 // pred_region
      // Predicated region
      $region17: #{feature_extract_rec_forward.6} parent=15 // pred_check
        %p150 = pneg %p43
      $region18: #{feature_extract_rec_forward.6} parent=15 // pred_check_branch
        %152 = sbr.rel (%p150) target = $region20
      $region19: #{feature_extract_rec_forward.6} parent=15 // pred_region
        %p153 = scmp.lt.s32.totalorder %s16, 1
        %s154 = scalar_select %p153, %s16, 1
        %p155 = scmp.lt.s32.totalorder %s17, 0
        %s156 = scalar_select %p155, %s17, 0
        %s157 = smul.addr %s154, 8
        %s158 = sadd.s32 %s156, %s157
        %s159 = smul.addr %s158, 8
        %s160 = scalar_lea.vmem %s0, %s159
      $region20: #{feature_extract_rec_forward.6} parent=15 // pred_fallthru
        _
      // Predicated region
      $region21: #{feature_extract_rec_forward.6} parent=15 // pred_check
        %p161 = pneg %p69
      $region22: #{feature_extract_rec_forward.6} parent=15 // pred_check_branch
        %163 = sbr.rel (%p161) target = $region24
      $region23: #{feature_extract_rec_forward.6} parent=15 // pred_region
        %p164 = scmp.lt.s32.totalorder %s16, 1
        %s165 = scalar_select %p164, %s16, 1
        %s166 = smul.addr %s165, 8
        %s167 = smul.addr %s166, 8
        %s168 = scalar_lea.vmem %s1, %s167
      $region24: #{feature_extract_rec_forward.6} parent=15 // pred_fallthru
        _
      // Predicated region
      $region25: #{feature_extract_rec_forward.6} parent=15 // pred_check
        %p169 = pneg %p97
      $region26: #{feature_extract_rec_forward.6} parent=15 // pred_check_branch
        %171 = sbr.rel (%p169) target = $region28
      $region27: #{feature_extract_rec_forward.6} parent=15 // pred_region
        %s172 = smul.u32 8, %s17
        %p173 = scmp.lt.s32.totalorder %s16, 1
        %s174 = scalar_select %p173, %s16, 1
        %p175 = scmp.lt.s32.totalorder %s172, 7
        %s176 = scalar_select %p175, %s172, 7
        %s177 = smul.addr %s174, 8
        %s178 = sadd.s32 %s176, %s177
        %s179 = smul.addr %s178, 8
        %s180 = scalar_lea.vmem %s2, %s179
        %s181 = smul.u32 8, %s17
      $region28: #{feature_extract_rec_forward.6} parent=15 // pred_fallthru
        _
    $region16: #{feature_extract_rec_forward.6} parent=5 // pred_fallthru
      _
    %p182 = scmp.le.s32.totalorder 1, %s9
    %p183 = scmp.lt.s32.totalorder %s9, 3
    %p184 = pnand %p182, %p183
    %p185 = pneg %p184
    // Predicated region
    $region29: #{feature_extract_rec_forward.6} parent=5 // pred_check
      _
    $region30: #{feature_extract_rec_forward.6} parent=5 // pred_check_branch
      %187 = sbr.rel (%p184) target = $region32
    $region31: #{feature_extract_rec_forward.6} parent=5 // pred_region
      %s188 = ssub.s32 %s9, 1
      %p189 = scmp.lt.s32.totalorder %s18, 1
      %s190 = scalar_select %p189, %s18, 1
      %p191 = scmp.lt.s32.totalorder %s19, 0
      %s192 = scalar_select %p191, %s19, 0
      %s193 = smul.addr %s190, 8
      %s194 = sadd.s32 %s192, %s193
      %s195 = smul.addr %s194, 8
      %s196 = scalar_lea.vmem %s0, %s195
      %p197 = pneg %p49
      %p198 = pneg %p46
      %p199 = scmp.lt.s32.totalorder %s18, 1
      %s200 = scalar_select %p199, %s18, 1
      %s201 = smul.addr %s200, 8
      %s202 = smul.addr %s201, 8
      %s203 = scalar_lea.vmem %s1, %s202
      %p204 = pneg %p75
      %p205 = pneg %p72
      %s206 = smul.u32 8, %s19
      %p207 = scmp.lt.s32.totalorder %s18, 1
      %s208 = scalar_select %p207, %s18, 1
      %p209 = scmp.lt.s32.totalorder %s206, 7
      %s210 = scalar_select %p209, %s206, 7
      %s211 = smul.addr %s208, 8
      %s212 = sadd.s32 %s210, %s211
      %s213 = smul.addr %s212, 8
      %s214 = scalar_lea.vmem %s2, %s213
      %p215 = pneg %p103
      %p216 = pneg %p100
      %p217 = pneg %p131
      %p218 = pneg %p128
      %s219 = smul.u32 8, %s19
      %p220 = scmp.lt.s32.totalorder %s18, 1
      %s221 = scalar_select %p220, %s18, 1
      %p222 = scmp.lt.s32.totalorder %s219, 7
      %s223 = scalar_select %p222, %s219, 7
      %s224 = smul.addr %s221, 8
      %s225 = sadd.s32 %s223, %s224
      %s226 = smul.addr %s225, 8
      %s227 = scalar_lea.vmem %s3, %s226
      %p228 = scmp.lt.s32.totalorder %s18, 1
      %s229 = scalar_select %p228, %s18, 1
      %p230 = scmp.lt.s32.totalorder %s19, 0
      %s231 = scalar_select %p230, %s19, 0
      %s232 = smul.addr %s229, 8
      %s233 = sadd.s32 %s231, %s232
      %s234 = smul.addr %s233, 8
      %s235 = scalar_lea.vmem %s0, %s234
      %p236 = scmp.lt.s32.totalorder %s18, 1
      %s237 = scalar_select %p236, %s18, 1
      %s238 = smul.addr %s237, 8
      %s239 = smul.addr %s238, 8
      %s240 = scalar_lea.vmem %s1, %s239
      %s241 = smul.u32 8, %s19
      %p242 = scmp.lt.s32.totalorder %s18, 1
      %s243 = scalar_select %p242, %s18, 1
      %p244 = scmp.lt.s32.totalorder %s241, 7
      %s245 = scalar_select %p244, %s241, 7
      %s246 = smul.addr %s243, 8
      %s247 = sadd.s32 %s245, %s246
      %s248 = smul.addr %s247, 8
      %s249 = scalar_lea.vmem %s2, %s248
      %s250 = smul.u32 8, %s19
      %s251 = smul.u32 8, %s19
      %p252 = scmp.lt.s32.totalorder %s18, 1
      %s253 = scalar_select %p252, %s18, 1
      %p254 = scmp.lt.s32.totalorder %s251, 7
      %s255 = scalar_select %p254, %s251, 7
      %s256 = smul.addr %s253, 8
      %s257 = sadd.s32 %s255, %s256
      %s258 = smul.addr %s257, 8
      %s259 = scalar_lea.vmem %s3, %s258
      %s260 = smul.u32 8, %s19
      %v261 = vld [vmem:[%s235] sm:$0xff]
      %v262 = vld [vmem:[%s235 + $0x8] sm:$0xff]
      %v263 = vld [vmem:[%s235 + $0x10] sm:$0xff]
      %v264 = vld [vmem:[%s235 + $0x18] sm:$0xff]
      %v265 = vld [vmem:[%s235 + $0x20] sm:$0xff]
      %v266 = vld [vmem:[%s235 + $0x28] sm:$0xff]
      %v267 = vld [vmem:[%s235 + $0x30] sm:$0xff]
      %v268 = vld [vmem:[%s235 + $0x38] sm:$0xff]
      %v269 = vld [vmem:[%s240] sm:$0xff]
      %v270 = vld [vmem:[%s240 + $0x8] sm:$0xff]
      %v271 = vld [vmem:[%s240 + $0x10] sm:$0xff]
      %v272 = vld [vmem:[%s240 + $0x18] sm:$0xff]
      %v273 = vld [vmem:[%s240 + $0x20] sm:$0xff]
      %v274 = vld [vmem:[%s240 + $0x28] sm:$0xff]
      %v275 = vld [vmem:[%s240 + $0x30] sm:$0xff]
      %v276 = vld [vmem:[%s240 + $0x38] sm:$0xff]
      %v277 = vld [vmem:[%s249] sm:$0xff]
      %v278 = vld [vmem:[%s249 + $0x8] sm:$0xff]
      %v279 = vld [vmem:[%s249 + $0x10] sm:$0xff]
      %v280 = vld [vmem:[%s249 + $0x18] sm:$0xff]
      %v281 = vld [vmem:[%s249 + $0x20] sm:$0xff]
      %v282 = vld [vmem:[%s249 + $0x28] sm:$0xff]
      %v283 = vld [vmem:[%s249 + $0x30] sm:$0xff]
      %v284 = vld [vmem:[%s249 + $0x38] sm:$0xff]
      %285 = vxpose.xlu0.b32.start [1/16] %v261, 128
      %286 = vxpose.xlu0.b32.cont [2/16] %v262, 128
      %287 = vxpose.xlu0.b32.cont [3/16] %v263, 128
      %288 = vxpose.xlu0.b32.cont [4/16] %v264, 128
      %289 = vxpose.xlu0.b32.cont [5/16] %v265, 128
      %290 = vxpose.xlu0.b32.cont [6/16] %v266, 128
      %291 = vxpose.xlu0.b32.cont [7/16] %v267, 128
      %292 = vxpose.xlu0.b32.cont [8/16] %v268, 128
      %293 = vxpose.xlu0.b32.cont [9/16] 0.0, 128
      %294 = vxpose.xlu0.b32.cont [10/16] 0.0, 128
      %295 = vxpose.xlu0.b32.cont [11/16] 0.0, 128
      %296 = vxpose.xlu0.b32.cont [12/16] 0.0, 128
      %297 = vxpose.xlu0.b32.cont [13/16] 0.0, 128
      %298 = vxpose.xlu0.b32.cont [14/16] 0.0, 128
      %299 = vxpose.xlu0.b32.cont [15/16] 0.0, 128
      %300 = vxpose.xlu0.b32.end [16/16] 0.0, 128
      %v301 = vpop.trf.xlu0
      %v302 = vpop.trf.xlu0
      %v303 = vpop.trf.xlu0
      %v304 = vpop.trf.xlu0
      %v305 = vpop.trf.xlu0
      %v306 = vpop.trf.xlu0
      %v307 = vpop.trf.xlu0
      %v308 = vpop.trf.xlu0
      %v309 = vpop.trf.xlu0
      %v310 = vpop.trf.xlu0
      %v311 = vpop.trf.xlu0
      %v312 = vpop.trf.xlu0
      %v313 = vpop.trf.xlu0
      %v314 = vpop.trf.xlu0
      %v315 = vpop.trf.xlu0
      %v316 = vpop.trf.xlu0
      %vm317 = vcmask 523264
      %v319 = vsel %vm317, %v301, 0
      %v322 = vsel %vm317, %v302, 0
      %v325 = vsel %vm317, %v303, 0
      %v328 = vsel %vm317, %v304, 0
      %v331 = vsel %vm317, %v305, 0
      %v334 = vsel %vm317, %v306, 0
      %v337 = vsel %vm317, %v307, 0
      %v340 = vsel %vm317, %v308, 0
      %342 = vmatprep.subr.mxu0 0.0
      %343 = vmatpush1.msra.mxu0 %v269
      %344 = vmatprep.subr.mxu0 0.0
      %345 = vmatpush1.msra.mxu0 %v270
      %346 = vmatprep.subr.mxu0 0.0
      %347 = vmatpush1.msra.mxu0 %v271
      %348 = vmatprep.subr.mxu0 0.0
      %349 = vmatpush1.msra.mxu0 %v272
      %350 = vmatprep.subr.mxu0 0.0
      %351 = vmatpush1.msra.mxu0 %v273
      %352 = vmatprep.subr.mxu0 0.0
      %353 = vmatpush1.msra.mxu0 %v274
      %354 = vmatprep.subr.mxu0 0.0
      %355 = vmatpush1.msra.mxu0 %v275
      %356 = vmatprep.subr.mxu0 0.0
      %357 = vmatpush1.msra.mxu0 %v276
      %358 = vmatprep.subr.mxu0 0.0
      %359 = vmatpush1.msra.mxu0 0.0
      %360 = vmatprep.subr.mxu0 0.0
      %361 = vmatpush1.msra.mxu0 0.0
      %362 = vmatprep.subr.mxu0 0.0
      %363 = vmatpush1.msra.mxu0 0.0
      %364 = vmatprep.subr.mxu0 0.0
      %365 = vmatpush1.msra.mxu0 0.0
      %366 = vmatprep.subr.mxu0 0.0
      %367 = vmatpush1.msra.mxu0 0.0
      %368 = vmatprep.subr.mxu0 0.0
      %369 = vmatpush1.msra.mxu0 0.0
      %370 = vmatprep.subr.mxu0 0.0
      %371 = vmatpush1.msra.mxu0 0.0
      %372 = vmatprep.subr.mxu0 0.0
      %373 = vmatpush1.msra.mxu0 0.0
      %374 = vmatprep.subr.mxu0 0.0
      %375 = vmatpush1.msra.mxu0 0.0
      %376 = vmatprep.subr.mxu0 0.0
      %377 = vmatpush1.msra.mxu0 0.0
      %378 = vmatprep.subr.mxu0 0.0
      %379 = vmatpush1.msra.mxu0 0.0
      %380 = vmatprep.subr.mxu0 0.0
      %381 = vmatpush1.msra.mxu0 0.0
      %382 = vmatprep.subr.mxu0 0.0
      %383 = vmatpush1.msra.mxu0 0.0
      %384 = vmatprep.subr.mxu0 0.0
      %385 = vmatpush1.msra.mxu0 0.0
      %386 = vmatprep.subr.mxu0 0.0
      %387 = vmatpush1.msra.mxu0 0.0
      %388 = vmatprep.subr.mxu0 0.0
      %389 = vmatpush1.msra.mxu0 0.0
      %390 = vmatprep.subr.mxu0 0.0
      %391 = vmatpush1.msra.mxu0 0.0
      %392 = vmatprep.subr.mxu0 0.0
      %393 = vmatpush1.msra.mxu0 0.0
      %394 = vmatprep.subr.mxu0 0.0
      %395 = vmatpush1.msra.mxu0 0.0
      %396 = vmatprep.subr.mxu0 0.0
      %397 = vmatpush1.msra.mxu0 0.0
      %398 = vmatprep.subr.mxu0 0.0
      %399 = vmatpush1.msra.mxu0 0.0
      %400 = vmatprep.subr.mxu0 0.0
      %401 = vmatpush1.msra.mxu0 0.0
      %402 = vmatprep.subr.mxu0 0.0
      %403 = vmatpush1.msra.mxu0 0.0
      %404 = vmatprep.subr.mxu0 0.0
      %405 = vmatpush1.msra.mxu0 0.0
      %406 = vmatprep.mubr.f32.mxu0 0.0
      %407 = vmatmul.mubr.f32.gmra.mrb[0].mxu0 %v319
      %v408 = vpop.f32.mrb[0].mxu0
      %v409 = vadd.f32 0.0, %v408
      %v410 = vpop.f32.mrb[0].mxu0
      %411 = vmatprep.mubr.f32.mxu0 0.0
      %412 = vmatmul.mubr.f32.gmra.mrb[0].mxu0 %v322
      %v413 = vpop.f32.mrb[0].mxu0
      %v414 = vadd.f32 0.0, %v413
      %v415 = vpop.f32.mrb[0].mxu0
      %416 = vmatprep.mubr.f32.mxu0 0.0
      %417 = vmatmul.mubr.f32.gmra.mrb[0].mxu0 %v325
      %v418 = vpop.f32.mrb[0].mxu0
      %v419 = vadd.f32 0.0, %v418
      %v420 = vpop.f32.mrb[0].mxu0
      %421 = vmatprep.mubr.f32.mxu0 0.0
      %422 = vmatmul.mubr.f32.gmra.mrb[0].mxu0 %v328
      %v423 = vpop.f32.mrb[0].mxu0
      %v424 = vadd.f32 0.0, %v423
      %v425 = vpop.f32.mrb[0].mxu0
      %426 = vmatprep.mubr.f32.mxu0 0.0
      %427 = vmatmul.mubr.f32.gmra.mrb[0].mxu0 %v331
      %v428 = vpop.f32.mrb[0].mxu0
      %v429 = vadd.f32 0.0, %v428
      %v430 = vpop.f32.mrb[0].mxu0
      %431 = vmatprep.mubr.f32.mxu0 0.0
      %432 = vmatmul.mubr.f32.gmra.mrb[0].mxu0 %v334
      %v433 = vpop.f32.mrb[0].mxu0
      %v434 = vadd.f32 0.0, %v433
      %v435 = vpop.f32.mrb[0].mxu0
      %436 = vmatprep.mubr.f32.mxu0 0.0
      %437 = vmatmul.mubr.f32.gmra.mrb[0].mxu0 %v337
      %v438 = vpop.f32.mrb[0].mxu0
      %v439 = vadd.f32 0.0, %v438
      %v440 = vpop.f32.mrb[0].mxu0
      %441 = vmatprep.mubr.f32.mxu0 0.0
      %442 = vmatmul.mubr.f32.gmra.mrb[0].mxu0 %v340
      %v443 = vpop.f32.mrb[0].mxu0
      %v444 = vadd.f32 0.0, %v443
      %v445 = vpop.f32.mrb[0].mxu0
      %446 = vdwg.mxu0
      %v447 = vmul.f32 %v269, %v269
      %v448 = vmul.f32 %v270, %v270
      %v449 = vmul.f32 %v271, %v271
      %v450 = vmul.f32 %v272, %v272
      %v451 = vmul.f32 %v273, %v273
      %v452 = vmul.f32 %v274, %v274
      %v453 = vmul.f32 %v275, %v275
      %v454 = vmul.f32 %v276, %v276
      %v455 = vsel %vm317, %v447, 0.0
      %v456 = vsel %vm317, %v448, 0.0
      %v457 = vadd.f32 %v455, %v456
      %v458 = vsel %vm317, %v449, 0.0
      %v459 = vadd.f32 %v457, %v458
      %v460 = vsel %vm317, %v450, 0.0
      %v461 = vadd.f32 %v459, %v460
      %v462 = vsel %vm317, %v451, 0.0
      %v463 = vadd.f32 %v461, %v462
      %v464 = vsel %vm317, %v452, 0.0
      %v465 = vadd.f32 %v463, %v464
      %v466 = vsel %vm317, %v453, 0.0
      %v467 = vadd.f32 %v465, %v466
      %v468 = vsel %vm317, %v454, 0.0
      %v469 = vadd.f32 %v467, %v468
      %v470 = vrot.slane %v469, 4
      %v471 = vadd.f32 %v469, %v470
      %v472 = vrot.slane %v471, 2
      %v473 = vadd.f32 %v471, %v472
      %v474 = vrot.slane %v473, 1
      %v475 = vadd.f32 %v473, %v474
      %v476 = vmul.f32 %v409, 2.0
      %v477 = vmul.f32 %v414, 2.0
      %v478 = vmul.f32 %v419, 2.0
      %v479 = vmul.f32 %v424, 2.0
      %v480 = vmul.f32 %v429, 2.0
      %v481 = vmul.f32 %v434, 2.0
      %v482 = vmul.f32 %v439, 2.0
      %v483 = vmul.f32 %v444, 2.0
      %485 = vset.pattern.permute.xlu0 0
      %486 = vperm.xlu0 %485, %v277
      %v487 = vpop.permute.xlu0 %486
      %490 = vset.pattern.permute.xlu0 0
      %491 = vperm.xlu0 %490, %v278
      %v492 = vpop.permute.xlu0 %491
      %495 = vset.pattern.permute.xlu0 0
      %496 = vperm.xlu0 %495, %v279
      %v497 = vpop.permute.xlu0 %496
      %500 = vset.pattern.permute.xlu0 0
      %501 = vperm.xlu0 %500, %v280
      %v502 = vpop.permute.xlu0 %501
      %505 = vset.pattern.permute.xlu0 0
      %506 = vperm.xlu0 %505, %v281
      %v507 = vpop.permute.xlu0 %506
      %510 = vset.pattern.permute.xlu0 0
      %511 = vperm.xlu0 %510, %v282
      %v512 = vpop.permute.xlu0 %511
      %515 = vset.pattern.permute.xlu0 0
      %516 = vperm.xlu0 %515, %v283
      %v517 = vpop.permute.xlu0 %516
      %520 = vset.pattern.permute.xlu0 0
      %521 = vperm.xlu0 %520, %v284
      %v522 = vpop.permute.xlu0 %521
      %v524 = vsub.f32 %v476, %v487
      %v525 = vsub.f32 %v477, %v492
      %v526 = vsub.f32 %v478, %v497
      %v527 = vsub.f32 %v479, %v502
      %v528 = vsub.f32 %v480, %v507
      %v529 = vsub.f32 %v481, %v512
      %v530 = vsub.f32 %v482, %v517
      %v531 = vsub.f32 %v483, %v522
      %v532 = vsub.f32 %v524, %v475
      %v533 = vsub.f32 %v525, %v475
      %v534 = vsub.f32 %v526, %v475
      %v535 = vsub.f32 %v527, %v475
      %v536 = vsub.f32 %v528, %v475
      %v537 = vsub.f32 %v529, %v475
      %v538 = vsub.f32 %v530, %v475
      %v539 = vsub.f32 %v531, %v475
      %540 = vst.msk [vmem:[%s259] sm:$0xff] %vm317, %v532
      %541 = vst.msk [vmem:[%s259 + $0x8] sm:$0xff] %vm317, %v533
      %542 = vst.msk [vmem:[%s259 + $0x10] sm:$0xff] %vm317, %v534
      %543 = vst.msk [vmem:[%s259 + $0x18] sm:$0xff] %vm317, %v535
      %544 = vst.msk [vmem:[%s259 + $0x20] sm:$0xff] %vm317, %v536
      %545 = vst.msk [vmem:[%s259 + $0x28] sm:$0xff] %vm317, %v537
      %546 = vst.msk [vmem:[%s259 + $0x30] sm:$0xff] %vm317, %v538
      %547 = vst.msk [vmem:[%s259 + $0x38] sm:$0xff] %vm317, %v539
      %s548 = smul.u32 8, %s19
      %p549 = scmp.lt.s32.totalorder %s18, 1
      %s550 = scalar_select %p549, %s18, 1
      %p551 = scmp.lt.s32.totalorder %s548, 7
      %s552 = scalar_select %p551, %s548, 7
      %s553 = smul.addr %s550, 8
      %s554 = sadd.s32 %s552, %s553
      %s555 = smul.addr %s554, 8
      %s556 = scalar_lea.vmem %s3, %s555
      // Predicated region
      $region33: #{feature_extract_rec_forward.6} parent=31 // pred_check
        %p557 = pneg %p128
      $region34: #{feature_extract_rec_forward.6} parent=31 // pred_check_branch
        %559 = sbr.rel (%p557) target = $region36
      $region35: #{feature_extract_rec_forward.6} parent=31 // pred_region
        %s560 = smul.u32 8, %s19
      $region36: #{feature_extract_rec_forward.6} parent=31 // pred_fallthru
        _
    $region32: #{feature_extract_rec_forward.6} parent=5 // pred_fallthru
      _
    %p561 = scmp.le.s32.totalorder 2, %s9
    // Predicated region
    $region37: #{feature_extract_rec_forward.6} parent=5 // pred_check
      %p562 = pneg %p561
    $region38: #{feature_extract_rec_forward.6} parent=5 // pred_check_branch
      %564 = sbr.rel (%p562) target = $region40
    $region39: #{feature_extract_rec_forward.6} parent=5 // pred_region
      %s565 = ssub.s32 %s9, 2
      // Predicated region
      $region41: #{feature_extract_rec_forward.6} parent=39 // pred_check
        %p566 = pneg %p134
      $region42: #{feature_extract_rec_forward.6} parent=39 // pred_check_branch
        %568 = sbr.rel (%p566) target = $region44
      $region43: #{feature_extract_rec_forward.6} parent=39 // pred_region
        %s569 = smul.u32 8, %s21
        %p570 = scmp.lt.s32.totalorder %s20, 1
        %s571 = scalar_select %p570, %s20, 1
        %p572 = scmp.lt.s32.totalorder %s569, 7
        %s573 = scalar_select %p572, %s569, 7
        %s574 = smul.addr %s571, 8
        %s575 = sadd.s32 %s573, %s574
        %s576 = smul.addr %s575, 8
        %s577 = scalar_lea.vmem %s3, %s576
      $region44: #{feature_extract_rec_forward.6} parent=39 // pred_fallthru
        _
    $region40: #{feature_extract_rec_forward.6} parent=5 // pred_fallthru
      _
  $region6: #{feature_extract_rec_forward.6} parent=0 // loop_footer
    %s13 = sadd.s32 1, %s9
  $region7: #{feature_extract_rec_forward.6} parent=0 // loop_footer_branch
    %8 = sbr.rel target = $region3
  $region8: #{feature_extract_rec_forward.6} parent=0 // loop_exit
    _

// kernel: feature_extract_rec_forward.7
$region0: #{feature_extract_rec_forward.7}
  #allocation0 [shape = 'u32[]', space=smem, size = 0x4, offset = 0x4, fixed_abs, tag = 'smem constant byte address 0x4 - core index']
  #allocation1 [shape = 'u32[144,128]{1,0:T(1,128)}', space=vmem, size = 0x12000, scoped, tag = 'internal scratch']
  %s0 = inlined_call_operand.vmem [shape: bf16[2,64,1280], index: 0, kind: input, shape index: {}]
  %s1 = inlined_call_operand.vmem [shape: bf16[64,64], index: 1, kind: input, shape index: {}]
  %s2 = inlined_call_operand.vmem [shape: f32[2,64,64], index: 2, kind: output, shape index: {}]
  %s3 = sld [smem:[#allocation0]]
  $region87: #{feature_extract_rec_forward.7} parent=0
    _
  %s5 = ssub.s32 1, %s3
  %s6 = scalar_select 0, %s5, %s3
  $region1: #{feature_extract_rec_forward.7} parent=0
    #allocation2 [shape = 'u8[65536]{0}', space=vmem, size = 0x10000, scoped, tag = 'input window, operand 0']
    loop: start=0, step=1, limit=12
    $region2: #{feature_extract_rec_forward.7} parent=1 // loop_pre_header
      _
    $region3: #{feature_extract_rec_forward.7} parent=1 // loop_header
      %s8 = sphi 0, %s12
      %p9 = scmp.ge.s32.totalorder %s8, 12
      %s15 = sphi 0, %s27
      %s16 = sphi 0, %s23
      %s17 = sphi 0, %s15
      %s18 = sphi 0, %s16
      %s19 = sphi 0, %s17
      %s20 = sphi 0, %s18
      %s32 = sphi 0, %s34
      %s35 = sphi 0, %s32
      %s36 = sphi 0, %s35
      %s52 = sphi 0, %s36
      %s56 = sphi 0, %s56
      %s58 = sphi 0, %s56
      %s59 = sphi 0, %s58
      %s73 = sphi 0, %s59
      %s79 = sphi 0, %s81
      %s82 = sphi 0, %s79
      %s83 = sphi 0, %s82
      %s99 = sphi 0, %s83
    $region4: #{feature_extract_rec_forward.7} parent=1 // loop_header_branch
      %11 = sbr.rel (%p9) target = $region8
    $region5: #{feature_extract_rec_forward.7} parent=1 // loop_body
      %s13 = ssub.s32 %s8, 1
      %s14 = ssub.s32 %s8, 2
      %s21 = sadd.s32 1, %s16
      %p22 = scmp.ge.s32.totalorder %s21, 5
      %s23 = scalar_select %p22, 0, %s21
      %s24 = sadd.s32 1, %s15
      %s25 = scalar_select %p22, %s24, %s15
      %p26 = scmp.ge.s32.totalorder %s25, 2
      %s27 = scalar_select %p26, 0, %s25
      %s28 = ssub.s32 %s15, %s27
      %s29 = ssub.s32 %s16, %s23
      %s30 = sor.u32 %s28, %s29
      %p31 = scmp.eq.s32.totalorder %s30, 0
      %s33 = sadd.s32 %s32, 1
      %s34 = scalar_select %p31, %s32, %s33
      %p37 = pneg %p31
      %p38 = scmp.eq.s32.totalorder %s8, 9
      %p39 = por %p37, %p38
      %p40 = scmp.ne.s32.totalorder %s32, %s35
      %p41 = scmp.eq.s32.totalorder %s8, 0
      %p42 = por %p40, %p41
      %p43 = scmp.ne.s32.totalorder %s32, %s35
      %p44 = scmp.eq.s32.totalorder %s13, 9
      %p45 = por %p43, %p44
      %p46 = scmp.ne.s32.totalorder %s35, %s36
      %p47 = scmp.eq.s32.totalorder %s13, 0
      %p48 = por %p46, %p47
      %p49 = scmp.ne.s32.totalorder %s35, %s36
      %p50 = scmp.eq.s32.totalorder %s14, 9
      %p51 = por %p49, %p50
      %p53 = scmp.ne.s32.totalorder %s36, %s52
      %p54 = scmp.eq.s32.totalorder %s14, 0
      %p55 = por %p53, %p54
      %s57 = sadd.s32 %s56, 1
      %p60 = scmp.eq.s32.totalorder %s8, 9
      %p61 = scmp.ne.s32.totalorder %s56, %s58
      %p62 = scmp.eq.s32.totalorder %s8, 0
      %p63 = por %p61, %p62
      %p64 = scmp.ne.s32.totalorder %s56, %s58
      %p65 = scmp.eq.s32.totalorder %s13, 9
      %p66 = por %p64, %p65
      %p67 = scmp.ne.s32.totalorder %s58, %s59
      %p68 = scmp.eq.s32.totalorder %s13, 0
      %p69 = por %p67, %p68
      %p70 = scmp.ne.s32.totalorder %s58, %s59
      %p71 = scmp.eq.s32.totalorder %s14, 9
      %p72 = por %p70, %p71
      %p74 = scmp.ne.s32.totalorder %s59, %s73
      %p75 = scmp.eq.s32.totalorder %s14, 0
      %p76 = por %p74, %p75
      %s77 = ssub.s32 %s15, %s27
      %p78 = scmp.eq.s32.totalorder %s77, 0
      %s80 = sadd.s32 %s79, 1
      %s81 = scalar_select %p78, %s79, %s80
      %p84 = pneg %p78
      %p85 = scmp.eq.s32.totalorder %s8, 9
      %p86 = por %p84, %p85
      %p87 = scmp.ne.s32.totalorder %s79, %s82
      %p88 = scmp.eq.s32.totalorder %s8, 0
      %p89 = por %p87, %p88
      %p90 = scmp.ne.s32.totalorder %s79, %s82
      %p91 = scmp.eq.s32.totalorder %s13, 9
      %p92 = por %p90, %p91
      %p93 = scmp.ne.s32.totalorder %s82, %s83
      %p94 = scmp.eq.s32.totalorder %s13, 0
      %p95 = por %p93, %p94
      %p96 = scmp.ne.s32.totalorder %s82, %s83
      %p97 = scmp.eq.s32.totalorder %s14, 9
      %p98 = por %p96, %p97
      %p100 = scmp.ne.s32.totalorder %s83, %s99
      %p101 = scmp.eq.s32.totalorder %s14, 0
      %p102 = por %p100, %p101
      %p103 = scmp.le.s32.totalorder 1, %s8
      %p104 = scmp.lt.s32.totalorder %s8, 11
      %p105 = pnand %p103, %p104
      %p106 = pneg %p105
      // Predicated region
      $region9: #{feature_extract_rec_forward.7} parent=5 // pred_check
        _
      $region10: #{feature_extract_rec_forward.7} parent=5 // pred_check_branch
        %108 = sbr.rel (%p105) target = $region12
      $region11: #{feature_extract_rec_forward.7} parent=5 // pred_region
        %s109 = ssub.s32 %s8, 1
        // Predicated region
        $region13: #{feature_extract_rec_forward.7} parent=11 // pred_check
          %p110 = pneg %p69
        $region14: #{feature_extract_rec_forward.7} parent=11 // pred_check_branch
          %112 = sbr.rel (%p110) target = $region16
        $region15: #{feature_extract_rec_forward.7} parent=11 // pred_region
          _
        $region16: #{feature_extract_rec_forward.7} parent=11 // pred_fallthru
          _
      $region12: #{feature_extract_rec_forward.7} parent=5 // pred_fallthru
        _
      %p113 = scmp.lt.s32.totalorder %s8, 10
      // Predicated region
      $region17: #{feature_extract_rec_forward.7} parent=5 // pred_check
        %p114 = pneg %p113
      $region18: #{feature_extract_rec_forward.7} parent=5 // pred_check_branch
        %116 = sbr.rel (%p114) target = $region20
      $region19: #{feature_extract_rec_forward.7} parent=5 // pred_region
        // Predicated region
        $region21: #{feature_extract_rec_forward.7} parent=19 // pred_check
          %p117 = pneg %p42
        $region22: #{feature_extract_rec_forward.7} parent=19 // pred_check_branch
          %119 = sbr.rel (%p117) target = $region24
        $region23: #{feature_extract_rec_forward.7} parent=19 // pred_region
          %s120 = sand.u32 %s32, 1
          %s121 = sand.u32 %s32, 1
          %s122 = smul.addr %s121, 64
          %s123 = scalar_lea.vmem [#allocation2], %s122
          %s124 = smul.u32 2, %s16
          %s125 = smul.addr %s15, 80
          %s126 = sadd.s32 %s124, %s125
          %s127 = smul.addr %s126, 4
          %s128 = scalar_lea.vmem %s0, %s127
          // Predicated region
          $region25: #{feature_extract_rec_forward.7} parent=23 // pred_check
            _
          $region26: #{feature_extract_rec_forward.7} parent=23 // pred_check_branch
            %130 = sbr.rel (0) target = $region28
          $region27: #{feature_extract_rec_forward.7} parent=23 // pred_region
            // Predicated region
            $region29: #{feature_extract_rec_forward.7} parent=27 // pred_check
              _
            $region30: #{feature_extract_rec_forward.7} parent=27 // pred_check_branch
              %132 = sbr.rel (0) target = $region32
            $region31: #{feature_extract_rec_forward.7} parent=27 // pred_region
              // Predicated region
              $region44: #{feature_extract_rec_forward.7} parent=31 // pred_check
                _
              $region45: #{feature_extract_rec_forward.7} parent=31 // pred_check_branch
                %161 = sbr.rel (0) target = $region47
              $region46: #{feature_extract_rec_forward.7} parent=31 // pred_region
                loop: start=0, step=1, limit=1
                $region48: #{feature_extract_rec_forward.7} parent=46 // loop_pre_header
                  _
                $region49: #{feature_extract_rec_forward.7} parent=46 // loop_header
                  %s163 = sphi 0, %s167
                  %p164 = scmp.ge.s32.totalorder %s163, 1
                  %s168 = sphi %s128, %s128
                  %s169 = sphi %s123, %s123
                $region50: #{feature_extract_rec_forward.7} parent=46 // loop_header_branch
                  %166 = sbr.rel (%p164) target = $region54
                $region51: #{feature_extract_rec_forward.7} parent=46 // loop_body
                  %v170 = vld [vmem:[%s168] sm:$0xff]
                  %171 = vst [vmem:[%s169] sm:$0xff] %v170
                  %v172 = vld [vmem:[%s168 + $0x28] sm:$0xff]
                  %173 = vst [vmem:[%s169 + $0x8] sm:$0xff] %v172
                  %v174 = vld [vmem:[%s168 + $0x50] sm:$0xff]
                  %175 = vst [vmem:[%s169 + $0x10] sm:$0xff] %v174
                  %v176 = vld [vmem:[%s168 + $0x78] sm:$0xff]
                  %177 = vst [vmem:[%s169 + $0x18] sm:$0xff] %v176
                  %v178 = vld [vmem:[%s168 + $0xa0] sm:$0xff]
                  %179 = vst [vmem:[%s169 + $0x20] sm:$0xff] %v178
                  %v180 = vld [vmem:[%s168 + $0xc8] sm:$0xff]
                  %181 = vst [vmem:[%s169 + $0x28] sm:$0xff] %v180
                  %v182 = vld [vmem:[%s168 + $0xf0] sm:$0xff]
                  %183 = vst [vmem:[%s169 + $0x30] sm:$0xff] %v182
                  %v184 = vld [vmem:[%s168 + $0x118] sm:$0xff]
                  %185 = vst [vmem:[%s169 + $0x38] sm:$0xff] %v184
                $region52: #{feature_extract_rec_forward.7} parent=46 // loop_footer
                  %s167 = sadd.s32 1, %s163
                $region53: #{feature_extract_rec_forward.7} parent=46 // loop_footer_branch
                  %162 = sbr.rel target = $region49
                $region54: #{feature_extract_rec_forward.7} parent=46 // loop_exit
                  _
              $region47: #{feature_extract_rec_forward.7} parent=31 // pred_fallthru
                _
              // Predicated region
              $region55: #{feature_extract_rec_forward.7} parent=31 // pred_check
                _
              $region56: #{feature_extract_rec_forward.7} parent=31 // pred_check_branch
                %187 = sbr.rel target = $region58
              $region57: #{feature_extract_rec_forward.7} parent=31 // pred_region
                _
              $region58: #{feature_extract_rec_forward.7} parent=31 // pred_fallthru
                _
            $region32: #{feature_extract_rec_forward.7} parent=27 // pred_fallthru
              _
            // Predicated region
            $region33: #{feature_extract_rec_forward.7} parent=27 // pred_check
              _
            $region34: #{feature_extract_rec_forward.7} parent=27 // pred_check_branch
              %134 = sbr.rel target = $region36
            $region35: #{feature_extract_rec_forward.7} parent=27 // pred_region
              loop: start=0, step=1, limit=1
              $region37: #{feature_extract_rec_forward.7} parent=35 // loop_pre_header
                _
              $region38: #{feature_extract_rec_forward.7} parent=35 // loop_header
                %s137 = sphi 0, %s141
                %p138 = scmp.ge.s32.totalorder %s137, 1
                %s142 = sphi %s128, %s128
                %s143 = sphi %s123, %s123
              $region39: #{feature_extract_rec_forward.7} parent=35 // loop_header_branch
                %140 = sbr.rel (%p138) target = $region43
              $region40: #{feature_extract_rec_forward.7} parent=35 // loop_body
                %v144 = vld [vmem:[%s142] sm:$0xff]
                %145 = vst [vmem:[%s143] sm:$0xff] %v144
                %v146 = vld [vmem:[%s142 + $0x28] sm:$0xff]
                %147 = vst [vmem:[%s143 + $0x8] sm:$0xff] %v146
                %v148 = vld [vmem:[%s142 + $0x50] sm:$0xff]
                %149 = vst [vmem:[%s143 + $0x10] sm:$0xff] %v148
                %v150 = vld [vmem:[%s142 + $0x78] sm:$0xff]
                %151 = vst [vmem:[%s143 + $0x18] sm:$0xff] %v150
                %v152 = vld [vmem:[%s142 + $0xa0] sm:$0xff]
                %153 = vst [vmem:[%s143 + $0x20] sm:$0xff] %v152
                %v154 = vld [vmem:[%s142 + $0xc8] sm:$0xff]
                %155 = vst [vmem:[%s143 + $0x28] sm:$0xff] %v154
                %v156 = vld [vmem:[%s142 + $0xf0] sm:$0xff]
                %157 = vst [vmem:[%s143 + $0x30] sm:$0xff] %v156
                %v158 = vld [vmem:[%s142 + $0x118] sm:$0xff]
                %159 = vst [vmem:[%s143 + $0x38] sm:$0xff] %v158
              $region41: #{feature_extract_rec_forward.7} parent=35 // loop_footer
                %s141 = sadd.s32 1, %s137
              $region42: #{feature_extract_rec_forward.7} parent=35 // loop_footer_branch
                %136 = sbr.rel target = $region38
              $region43: #{feature_extract_rec_forward.7} parent=35 // loop_exit
                _
            $region36: #{feature_extract_rec_forward.7} parent=27 // pred_fallthru
              _
          $region28: #{feature_extract_rec_forward.7} parent=23 // pred_fallthru
            _
          %188 = vnop
        $region24: #{feature_extract_rec_forward.7} parent=19 // pred_fallthru
          _
      $region20: #{feature_extract_rec_forward.7} parent=5 // pred_fallthru
        _
      %p189 = scmp.le.s32.totalorder 1, %s8
      %p190 = scmp.lt.s32.totalorder %s8, 11
      %p191 = pnand %p189, %p190
      %p192 = pneg %p191
      // Predicated region
      $region59: #{feature_extract_rec_forward.7} parent=5 // pred_check
        _
      $region60: #{feature_extract_rec_forward.7} parent=5 // pred_check_branch
        %194 = sbr.rel (%p191) target = $region62
      $region61: #{feature_extract_rec_forward.7} parent=5 // pred_region
        %s195 = ssub.s32 %s8, 1
        %s196 = sand.u32 %s35, 1
        %s197 = sand.u32 %s35, 1
        %s198 = smul.addr %s197, 64
        %s199 = scalar_lea.vmem [#allocation2], %s198
        // Predicated region
        $region63: #{feature_extract_rec_forward.7} parent=61 // pred_check
          %p200 = pneg %p48
        $region64: #{feature_extract_rec_forward.7} parent=61 // pred_check_branch
          %202 = sbr.rel (%p200) target = $region66
        $region65: #{feature_extract_rec_forward.7} parent=61 // pred_region
          _
        $region66: #{feature_extract_rec_forward.7} parent=61 // pred_fallthru
          _
        %s203 = sand.u32 %s35, 1
        %s204 = sand.u32 %s35, 1
        %s205 = smul.addr %s204, 64
        %s206 = scalar_lea.vmem [#allocation2], %s205
        %p207 = pneg %p48
        %p208 = pneg %p45
        %p209 = pneg %p69
        %p210 = pneg %p66
        %p211 = pneg %p95
        %p212 = pneg %p92
        %p213 = scmp.lt.s32.totalorder %s17, 1
        %s214 = scalar_select %p213, %s17, 1
        %s215 = smul.addr %s214, 8
        %s216 = smul.addr %s215, 8
        %s217 = scalar_lea.vmem %s2, %s216
        %s218 = smul.u32 2, %s18
        %p219 = scmp.lt.s32.totalorder %s17, 1
        %s220 = scalar_select %p219, %s17, 1
        %s221 = smul.addr %s220, 8
        %s222 = smul.addr %s221, 8
        %s223 = scalar_lea.vmem %s2, %s222
        %v226 = vld [vmem:[%s199] sm:$0xff]
        %v227 = vld [vmem:[%s199 + $0x8] sm:$0xff]
        %v228 = vld [vmem:[%s199 + $0x10] sm:$0xff]
        %v229 = vld [vmem:[%s199 + $0x18] sm:$0xff]
        %v230 = vld [vmem:[%s199 + $0x20] sm:$0xff]
        %v231 = vld [vmem:[%s199 + $0x28] sm:$0xff]
        %v232 = vld [vmem:[%s199 + $0x30] sm:$0xff]
        %v233 = vld [vmem:[%s199 + $0x38] sm:$0xff]
        %vm234 = vcmp.ge.bf16.partialorder %v226, 0
        %vm235 = vcmp.ge.bf16.partialorder %v227, 0
        %vm236 = vcmp.ge.bf16.partialorder %v228, 0
        %vm237 = vcmp.ge.bf16.partialorder %v229, 0
        %vm238 = vcmp.ge.bf16.partialorder %v230, 0
        %vm239 = vcmp.ge.bf16.partialorder %v231, 0
        %vm240 = vcmp.ge.bf16.partialorder %v232, 0
        %vm241 = vcmp.ge.bf16.partialorder %v233, 0
        %v242 = vmul.bf16 %v226, 1045249613
        %v243 = vmul.bf16 %v227, 1045249613
        %v244 = vmul.bf16 %v228, 1045249613
        %v245 = vmul.bf16 %v229, 1045249613
        %v246 = vmul.bf16 %v230, 1045249613
        %v247 = vmul.bf16 %v231, 1045249613
        %v248 = vmul.bf16 %v232, 1045249613
        %v249 = vmul.bf16 %v233, 1045249613
        %v250 = vsel %vm234, %v226, %v242
        %v251 = vsel %vm235, %v227, %v243
        %v252 = vsel %vm236, %v228, %v244
        %v253 = vsel %vm237, %v229, %v245
        %v254 = vsel %vm238, %v230, %v246
        %v255 = vsel %vm239, %v231, %v247
        %v256 = vsel %vm240, %v232, %v248
        %v257 = vsel %vm241, %v233, %v249
        %v258 = vld [vmem:[%s1] sm:$0xf]
        %v259 = vld [vmem:[%s1 + $0x4] sm:$0xf]
        %v260 = vld [vmem:[%s1 + $0x8] sm:$0xf]
        %v261 = vld [vmem:[%s1 + $0xc] sm:$0xf]
        %v262 = vld [vmem:[%s1 + $0x10] sm:$0xf]
        %v263 = vld [vmem:[%s1 + $0x14] sm:$0xf]
        %v264 = vld [vmem:[%s1 + $0x18] sm:$0xf]
        %v265 = vld [vmem:[%s1 + $0x1c] sm:$0xf]
        %v274 = vunpack.c.l.b16 %v258
        %v275 = vunpack.c.l.b16 %v259
        %v276 = vunpack.c.l.b16 %v260
        %v277 = vunpack.c.l.b16 %v261
        %v278 = vunpack.c.l.b16 %v262
        %v279 = vunpack.c.l.b16 %v263
        %v280 = vunpack.c.l.b16 %v264
        %v281 = vunpack.c.l.b16 %v265
        %v282 = vpack.c.b16 %v275, %v274
        %v283 = vpack.c.b16 %v277, %v276
        %v284 = vpack.c.b16 %v279, %v278
        %v285 = vpack.c.b16 %v281, %v280
        %v294 = vunpack.c.l.b16 %v250
        %v295 = vunpack.c.h.b16 %v250
        %v296 = vunpack.c.l.b16 %v251
        %v297 = vunpack.c.h.b16 %v251
        %v298 = vunpack.c.l.b16 %v252
        %v299 = vunpack.c.h.b16 %v252
        %v300 = vunpack.c.l.b16 %v253
        %v301 = vunpack.c.h.b16 %v253
        %v302 = vunpack.c.l.b16 %v254
        %v303 = vunpack.c.h.b16 %v254
        %v304 = vunpack.c.l.b16 %v255
        %v305 = vunpack.c.h.b16 %v255
        %v306 = vunpack.c.l.b16 %v256
        %v307 = vunpack.c.h.b16 %v256
        %v308 = vunpack.c.l.b16 %v257
        %v309 = vunpack.c.h.b16 %v257
        %v310 = vpack.c.b16 %v296, %v294
        %v311 = vpack.c.b16 %v297, %v295
        %v312 = vpack.c.b16 %v300, %v298
        %v313 = vpack.c.b16 %v301, %v299
        %v314 = vpack.c.b16 %v304, %v302
        %v315 = vpack.c.b16 %v305, %v303
        %v316 = vpack.c.b16 %v308, %v306
        %v317 = vpack.c.b16 %v309, %v307
        %vm326 = vcmask 523264
        %v328 = vsel %vm326, %v282, 0
        %v331 = vsel %vm326, %v283, 0
        %v334 = vsel %vm326, %v284, 0
        %v337 = vsel %vm326, %v285, 0
        %339 = vmatprep.subr.bf16.mxu0 %v311
        %340 = vmatpush1.bf16.msra.mxu0 %v310
        %341 = vmatprep.subr.bf16.mxu0 %v313
        %342 = vmatpush1.bf16.msra.mxu0 %v312
        %343 = vmatprep.subr.bf16.mxu0 %v315
        %344 = vmatpush1.bf16.msra.mxu0 %v314
        %345 = vmatprep.subr.bf16.mxu0 %v317
        %346 = vmatpush1.bf16.msra.mxu0 %v316
        %347 = vmatprep.subr.bf16.mxu0 0
        %348 = vmatpush1.bf16.msra.mxu0 0
        %349 = vmatprep.subr.bf16.mxu0 0
        %350 = vmatpush1.bf16.msra.mxu0 0
        %351 = vmatprep.subr.bf16.mxu0 0
        %352 = vmatpush1.bf16.msra.mxu0 0
        %353 = vmatprep.subr.bf16.mxu0 0
        %354 = vmatpush1.bf16.msra.mxu0 0
        %355 = vmatprep.subr.bf16.mxu0 0
        %356 = vmatpush1.bf16.msra.mxu0 0
        %357 = vmatprep.subr.bf16.mxu0 0
        %358 = vmatpush1.bf16.msra.mxu0 0
        %359 = vmatprep.subr.bf16.mxu0 0
        %360 = vmatpush1.bf16.msra.mxu0 0
        %361 = vmatprep.subr.bf16.mxu0 0
        %362 = vmatpush1.bf16.msra.mxu0 0
        %363 = vmatprep.subr.bf16.mxu0 0
        %364 = vmatpush1.bf16.msra.mxu0 0
        %365 = vmatprep.subr.bf16.mxu0 0
        %366 = vmatpush1.bf16.msra.mxu0 0
        %367 = vmatprep.subr.bf16.mxu0 0
        %368 = vmatpush1.bf16.msra.mxu0 0
        %369 = vmatprep.subr.bf16.mxu0 0
        %370 = vmatpush1.bf16.msra.mxu0 0
        %371 = vmatprep.mubr.bf16.mxu0 0
        %372 = vmatmul.mubr.bf16.gmra.mrb[0].mxu0 %v328
        %v373 = vpop.f32.mrb[0].mxu0
        %v374 = vadd.f32 0.0, %v373
        %v375 = vpop.f32.mrb[0].mxu0
        %v376 = vadd.f32 0.0, %v375
        %v377 = vpop.f32.mrb[0].mxu0
        %v378 = vadd.f32 0.0, %v377
        %v379 = vpop.f32.mrb[0].mxu0
        %v380 = vadd.f32 0.0, %v379
        %381 = vmatprep.mubr.bf16.mxu0 0
        %382 = vmatmul.mubr.bf16.gmra.mrb[0].mxu0 %v331
        %v383 = vpop.f32.mrb[0].mxu0
        %v384 = vadd.f32 0.0, %v383
        %v385 = vpop.f32.mrb[0].mxu0
        %v386 = vadd.f32 0.0, %v385
        %v387 = vpop.f32.mrb[0].mxu0
        %v388 = vadd.f32 0.0, %v387
        %v389 = vpop.f32.mrb[0].mxu0
        %v390 = vadd.f32 0.0, %v389
        %391 = vmatprep.mubr.bf16.mxu0 0
        %392 = vmatmul.mubr.bf16.gmra.mrb[0].mxu0 %v334
        %v393 = vpop.f32.mrb[0].mxu0
        %v394 = vadd.f32 0.0, %v393
        %v395 = vpop.f32.mrb[0].mxu0
        %v396 = vadd.f32 0.0, %v395
        %v397 = vpop.f32.mrb[0].mxu0
        %v398 = vadd.f32 0.0, %v397
        %v399 = vpop.f32.mrb[0].mxu0
        %v400 = vadd.f32 0.0, %v399
        %401 = vmatprep.mubr.bf16.mxu0 0
        %402 = vmatmul.mubr.bf16.gmra.mrb[0].mxu0 %v337
        %v403 = vpop.f32.mrb[0].mxu0
        %v404 = vadd.f32 0.0, %v403
        %v405 = vpop.f32.mrb[0].mxu0
        %v406 = vadd.f32 0.0, %v405
        %v407 = vpop.f32.mrb[0].mxu0
        %v408 = vadd.f32 0.0, %v407
        %v409 = vpop.f32.mrb[0].mxu0
        %v410 = vadd.f32 0.0, %v409
        %411 = vdwg.mxu0
        %vm412 = vcmp.ge.f32.partialorder %v374, 0.0
        %vm413 = vcmp.ge.f32.partialorder %v376, 0.0
        %vm414 = vcmp.ge.f32.partialorder %v378, 0.0
        %vm415 = vcmp.ge.f32.partialorder %v380, 0.0
        %vm416 = vcmp.ge.f32.partialorder %v384, 0.0
        %vm417 = vcmp.ge.f32.partialorder %v386, 0.0
        %vm418 = vcmp.ge.f32.partialorder %v388, 0.0
        %vm419 = vcmp.ge.f32.partialorder %v390, 0.0
        %vm420 = vcmp.ge.f32.partialorder %v394, 0.0
        %vm421 = vcmp.ge.f32.partialorder %v396, 0.0
        %vm422 = vcmp.ge.f32.partialorder %v398, 0.0
        %vm423 = vcmp.ge.f32.partialorder %v400, 0.0
        %vm424 = vcmp.ge.f32.partialorder %v404, 0.0
        %vm425 = vcmp.ge.f32.partialorder %v406, 0.0
        %vm426 = vcmp.ge.f32.partialorder %v408, 0.0
        %vm427 = vcmp.ge.f32.partialorder %v410, 0.0
        %v428 = vmul.f32 %v374, 0.2
        %v429 = vmul.f32 %v376, 0.2
        %v430 = vmul.f32 %v378, 0.2
        %v431 = vmul.f32 %v380, 0.2
        %v432 = vmul.f32 %v384, 0.2
        %v433 = vmul.f32 %v386, 0.2
        %v434 = vmul.f32 %v388, 0.2
        %v435 = vmul.f32 %v390, 0.2
        %v436 = vmul.f32 %v394, 0.2
        %v437 = vmul.f32 %v396, 0.2
        %v438 = vmul.f32 %v398, 0.2
        %v439 = vmul.f32 %v400, 0.2
        %v440 = vmul.f32 %v404, 0.2
        %v441 = vmul.f32 %v406, 0.2
        %v442 = vmul.f32 %v408, 0.2
        %v443 = vmul.f32 %v410, 0.2
        %v444 = vsel %vm412, %v374, %v428
        %v445 = vsel %vm413, %v376, %v429
        %v446 = vsel %vm414, %v378, %v430
        %v447 = vsel %vm415, %v380, %v431
        %v448 = vsel %vm416, %v384, %v432
        %v449 = vsel %vm417, %v386, %v433
        %v450 = vsel %vm418, %v388, %v434
        %v451 = vsel %vm419, %v390, %v435
        %v452 = vsel %vm420, %v394, %v436
        %v453 = vsel %vm421, %v396, %v437
        %v454 = vsel %vm422, %v398, %v438
        %v455 = vsel %vm423, %v400, %v439
        %v456 = vsel %vm424, %v404, %v440
        %v457 = vsel %vm425, %v406, %v441
        %v458 = vsel %vm426, %v408, %v442
        %v459 = vsel %vm427, %v410, %v443
        %468 = vrot.lane.b32.xlu0 %v444, 64
        %v469 = vpop.permute.xlu0 %468
        %470 = vrot.lane.b32.xlu0 %v446, 64
        %v471 = vpop.permute.xlu0 %470
        %472 = vrot.lane.b32.xlu0 %v448, 64
        %v473 = vpop.permute.xlu0 %472
        %474 = vrot.lane.b32.xlu0 %v450, 64
        %v475 = vpop.permute.xlu0 %474
        %476 = vrot.lane.b32.xlu0 %v452, 64
        %v477 = vpop.permute.xlu0 %476
        %478 = vrot.lane.b32.xlu0 %v454, 64
        %v479 = vpop.permute.xlu0 %478
        %480 = vrot.lane.b32.xlu0 %v456, 64
        %v481 = vpop.permute.xlu0 %480
        %482 = vrot.lane.b32.xlu0 %v458, 64
        %v483 = vpop.permute.xlu0 %482
        %v492 = vmax.f32 %v444, %v469
        %v493 = vmax.f32 %v446, %v471
        %v494 = vmax.f32 %v448, %v473
        %v495 = vmax.f32 %v450, %v475
        %v496 = vmax.f32 %v452, %v477
        %v497 = vmax.f32 %v454, %v479
        %v498 = vmax.f32 %v456, %v481
        %v499 = vmax.f32 %v458, %v483
        %v500 = vmax.f32 %v492, %v445
        %v501 = vmax.f32 %v493, %v447
        %v502 = vmax.f32 %v494, %v449
        %v503 = vmax.f32 %v495, %v451
        %v504 = vmax.f32 %v496, %v453
        %v505 = vmax.f32 %v497, %v455
        %v506 = vmax.f32 %v498, %v457
        %v507 = vmax.f32 %v499, %v459
        %516 = vrot.lane.b32.xlu0 %v445, 64
        %v517 = vpop.permute.xlu0 %516
        %518 = vrot.lane.b32.xlu0 %v447, 64
        %v519 = vpop.permute.xlu0 %518
        %520 = vrot.lane.b32.xlu0 %v449, 64
        %v521 = vpop.permute.xlu0 %520
        %522 = vrot.lane.b32.xlu0 %v451, 64
        %v523 = vpop.permute.xlu0 %522
        %524 = vrot.lane.b32.xlu0 %v453, 64
        %v525 = vpop.permute.xlu0 %524
        %526 = vrot.lane.b32.xlu0 %v455, 64
        %v527 = vpop.permute.xlu0 %526
        %528 = vrot.lane.b32.xlu0 %v457, 64
        %v529 = vpop.permute.xlu0 %528
        %530 = vrot.lane.b32.xlu0 %v459, 64
        %v531 = vpop.permute.xlu0 %530
        %v540 = vmax.f32 %v500, %v517
        %v541 = vmax.f32 %v501, %v519
        %v542 = vmax.f32 %v502, %v521
        %v543 = vmax.f32 %v503, %v523
        %v544 = vmax.f32 %v504, %v525
        %v545 = vmax.f32 %v505, %v527
        %v546 = vmax.f32 %v506, %v529
        %v547 = vmax.f32 %v507, %v531
        %p548 = scmp.eq.s32.totalorder %s18, 0
        // Predicated region
        $region67: #{feature_extract_rec_forward.7} parent=61 // pred_check
          %p549 = pneg %p548
        $region68: #{feature_extract_rec_forward.7} parent=61 // pred_check_branch
          %551 = sbr.rel (%p549) target = $region70
        $region69: #{feature_extract_rec_forward.7} parent=61 // pred_region
          %552 = vst.msk [vmem:[%s223] sm:$0xff] %vm326, %v540
          %553 = vst.msk [vmem:[%s223 + $0x8] sm:$0xff] %vm326, %v541
          %554 = vst.msk [vmem:[%s223 + $0x10] sm:$0xff] %vm326, %v542
          %555 = vst.msk [vmem:[%s223 + $0x18] sm:$0xff] %vm326, %v543
          %556 = vst.msk [vmem:[%s223 + $0x20] sm:$0xff] %vm326, %v544
          %557 = vst.msk [vmem:[%s223 + $0x28] sm:$0xff] %vm326, %v545
          %558 = vst.msk [vmem:[%s223 + $0x30] sm:$0xff] %vm326, %v546
          %559 = vst.msk [vmem:[%s223 + $0x38] sm:$0xff] %vm326, %v547
        $region70: #{feature_extract_rec_forward.7} parent=61 // pred_fallthru
          _
        %p560 = scmp.gt.s32.totalorder %s18, 0
        // Predicated region
        $region71: #{feature_extract_rec_forward.7} parent=61 // pred_check
          %p561 = pneg %p560
        $region72: #{feature_extract_rec_forward.7} parent=61 // pred_check_branch
          %563 = sbr.rel (%p561) target = $region74
        $region73: #{feature_extract_rec_forward.7} parent=61 // pred_region
          %v564 = vld [vmem:[%s223] sm:$0xff]
          %v565 = vld [vmem:[%s223 + $0x8] sm:$0xff]
          %v566 = vld [vmem:[%s223 + $0x10] sm:$0xff]
          %v567 = vld [vmem:[%s223 + $0x18] sm:$0xff]
          %v568 = vld [vmem:[%s223 + $0x20] sm:$0xff]
          %v569 = vld [vmem:[%s223 + $0x28] sm:$0xff]
          %v570 = vld [vmem:[%s223 + $0x30] sm:$0xff]
          %v571 = vld [vmem:[%s223 + $0x38] sm:$0xff]
          %v572 = vmax.f32 %v564, %v540
          %v573 = vmax.f32 %v565, %v541
          %v574 = vmax.f32 %v566, %v542
          %v575 = vmax.f32 %v567, %v543
          %v576 = vmax.f32 %v568, %v544
          %v577 = vmax.f32 %v569, %v545
          %v578 = vmax.f32 %v570, %v546
          %v579 = vmax.f32 %v571, %v547
          %580 = vst.msk [vmem:[%s223] sm:$0xff] %vm326, %v572
          %581 = vst.msk [vmem:[%s223 + $0x8] sm:$0xff] %vm326, %v573
          %582 = vst.msk [vmem:[%s223 + $0x10] sm:$0xff] %vm326, %v574
          %583 = vst.msk [vmem:[%s223 + $0x18] sm:$0xff] %vm326, %v575
          %584 = vst.msk [vmem:[%s223 + $0x20] sm:$0xff] %vm326, %v576
          %585 = vst.msk [vmem:[%s223 + $0x28] sm:$0xff] %vm326, %v577
          %586 = vst.msk [vmem:[%s223 + $0x30] sm:$0xff] %vm326, %v578
          %587 = vst.msk [vmem:[%s223 + $0x38] sm:$0xff] %vm326, %v579
        $region74: #{feature_extract_rec_forward.7} parent=61 // pred_fallthru
          _
        %p588 = scmp.lt.s32.totalorder %s17, 1
        %s589 = scalar_select %p588, %s17, 1
        %s590 = smul.addr %s589, 8
        %s591 = smul.addr %s590, 8
        %s592 = scalar_lea.vmem %s2, %s591
        // Predicated region
        $region75: #{feature_extract_rec_forward.7} parent=61 // pred_check
          %p593 = pneg %p92
        $region76: #{feature_extract_rec_forward.7} parent=61 // pred_check_branch
          %595 = sbr.rel (%p593) target = $region78
        $region77: #{feature_extract_rec_forward.7} parent=61 // pred_region
          _
        $region78: #{feature_extract_rec_forward.7} parent=61 // pred_fallthru
          _
      $region62: #{feature_extract_rec_forward.7} parent=5 // pred_fallthru
        _
      %p596 = scmp.le.s32.totalorder 2, %s8
      // Predicated region
      $region79: #{feature_extract_rec_forward.7} parent=5 // pred_check
        %p597 = pneg %p596
      $region80: #{feature_extract_rec_forward.7} parent=5 // pred_check_branch
        %599 = sbr.rel (%p597) target = $region82
      $region81: #{feature_extract_rec_forward.7} parent=5 // pred_region
        %s600 = ssub.s32 %s8, 2
        // Predicated region
        $region83: #{feature_extract_rec_forward.7} parent=81 // pred_check
          %p601 = pneg %p98
        $region84: #{feature_extract_rec_forward.7} parent=81 // pred_check_branch
          %603 = sbr.rel (%p601) target = $region86
        $region85: #{feature_extract_rec_forward.7} parent=81 // pred_region
          %p604 = scmp.lt.s32.totalorder %s19, 1
          %s605 = scalar_select %p604, %s19, 1
          %s606 = smul.addr %s605, 8
          %s607 = smul.addr %s606, 8
          %s608 = scalar_lea.vmem %s2, %s607
        $region86: #{feature_extract_rec_forward.7} parent=81 // pred_fallthru
          _
      $region82: #{feature_extract_rec_forward.7} parent=5 // pred_fallthru
        _
    $region6: #{feature_extract_rec_forward.7} parent=1 // loop_footer
      %s12 = sadd.s32 1, %s8
    $region7: #{feature_extract_rec_forward.7} parent=1 // loop_footer_branch
      %7 = sbr.rel target = $region3
    $region8: #{feature_extract_rec_forward.7} parent=1 // loop_exit
      _

</llo_original>
